<compile_context>
chip_gen: v6e
topology: v6e:2x2x1
jax: 0.10.0
libtpu: 0.0.40
codegen_flags: <defaults>
</compile_context>

<pallas_src>
import functools

import jax
import jax.numpy as jnp
import numpy as np
from jax.experimental import pallas as pl
from jax.experimental.pallas import tpu as pltpu

EPS = 1e-5
VMEM_LIMIT_BYTES = 32 * 1024 * 1024  # per-step working set here is <1 MiB; safe on v5e/v6e/v7x


# ----------------------------- kernels ---------------------------------------------------


def _shifted_rows(img):
    """img: (H, L) packed image.  Returns (H, 3L) = [row above | row | row below],
    zero-padded at the top/bottom (the H-direction conv halo)."""
    H, L = img.shape
    zero = jnp.zeros((1, L), img.dtype)
    up = jnp.concatenate([zero, img[: H - 1, :]], axis=0)      # row y-1  (ky = 0)
    down = jnp.concatenate([img[1:, :], zero], axis=0)         # row y+1  (ky = 2)
    return jnp.concatenate([up, img, down], axis=-1)


def conv_stats_kernel(x_ref, w_ref, y_ref, s_ref):
    """3x3 conv as a single fused matmul + per-image BN partial sums."""
    a = _shifted_rows(x_ref[0])                                           # (H, 3L) bf16
    y = jnp.dot(a, w_ref[...], preferred_element_type=jnp.float32)        # (H, L) f32 acc
    y_ref[0] = y
    s_ref[0] = jnp.concatenate(
        [jnp.sum(y, axis=0, keepdims=True),
         jnp.sum(y * y, axis=0, keepdims=True)], axis=0)                  # (2, L)


def bn_relu_conv_stats_kernel(y1_ref, sc_ref, sh_ref, w_ref, y2_ref, s_ref):
    """BN1 (pre-folded scale/shift) + ReLU (f32, lane-dense) + conv2 + BN partial sums."""
    a = jnp.maximum(y1_ref[0] * sc_ref[...] + sh_ref[...], 0.0)           # (H, L) f32
    a = _shifted_rows(a.astype(jnp.bfloat16))                             # (H, 3L) bf16
    y = jnp.dot(a, w_ref[...], preferred_element_type=jnp.float32)
    y2_ref[0] = y
    s_ref[0] = jnp.concatenate(
        [jnp.sum(y, axis=0, keepdims=True),
         jnp.sum(y * y, axis=0, keepdims=True)], axis=0)


def bn_add_relu_kernel(y2_ref, x_ref, sc_ref, sh_ref, o_ref):
    """BN2 (pre-folded) + residual add + ReLU, all f32 and fully lane-dense."""
    res = x_ref[0].astype(jnp.float32)
    o_ref[0] = jnp.maximum(y2_ref[0] * sc_ref[...] + sh_ref[...] + res, 0.0)


# ----------------------------- wrapper ----------------------------------------------------


def _pack_conv3x3_weight(w_oihw, W):
    """OIHW (Cout, Cin, 3, 3) -> (3*W*Cin, W*Cout) banded matrix so that, in the (H, W*C)
    row-packed layout, conv3x3(pad=1) == [row_above | row | row_below] @ Wmat.
    The W-direction zero padding is encoded in the band structure."""
    Cout, Cin = w_oihw.shape[0], w_oihw.shape[1]
    x_in = np.arange(W)[:, None]
    x_out = np.arange(W)[None, :]
    dx = x_in - x_out                                                    # (W, W)
    valid = (np.abs(dx) <= 1).astype(np.float32)                         # band mask
    kx = np.clip(dx + 1, 0, 2)                                           # kernel column index
    w_t = jnp.transpose(w_oihw, (2, 3, 1, 0))                            # (3, 3, Cin, Cout)
    blocks = w_t[:, kx, :, :] * valid[None, :, :, None, None]            # (3, W, W, Cin, Cout)
    m = jnp.transpose(blocks, (0, 1, 3, 2, 4)).reshape(3, W * Cin, W * Cout)
    return m.reshape(3 * W * Cin, W * Cout)


def _bn_scale_shift(part_sums, gamma, beta, count, W, C):
    """Fold per-image per-lane partial sums into per-channel BN scale/shift, then tile them
    back to packed (1, W*C) lane vectors for lane-dense application inside the kernels."""
    s = part_sums.reshape(-1, 2, W, C).sum(axis=(0, 2))                  # (2, C)
    mean = s[0] / count
    var = s[1] / count - mean * mean                                     # biased (training BN)
    scale = gamma * jax.lax.rsqrt(var + EPS)
    shift = beta - mean * scale
    return (jnp.tile(scale, W).reshape(1, W * C),
            jnp.tile(shift, W).reshape(1, W * C))


@jax.jit
def residual_block(x_nchw, w1_oihw, g1, b1, w2_oihw, g2, b2):
    """x_nchw: (N, C, H, W) f32; conv weights in PyTorch OIHW layout."""
    N, C, H, W = x_nchw.shape
    L = W * C
    count = N * H * W

    # channels-last row-packed layout (N, H, W*C); bf16 operands for the MXU.
    x_packed = jnp.transpose(x_nchw, (0, 2, 3, 1)).reshape(N, H, L)
    x_bf16 = x_packed.astype(jnp.bfloat16)
    w1p = _pack_conv3x3_weight(w1_oihw, W).astype(jnp.bfloat16)          # (3L, L)
    w2p = _pack_conv3x3_weight(w2_oihw, W).astype(jnp.bfloat16)

    act_spec = pl.BlockSpec((1, H, L), lambda i: (i, 0, 0))
    stat_spec = pl.BlockSpec((1, 2, L), lambda i: (i, 0, 0))
    wmat_spec = pl.BlockSpec((3 * L, L), lambda i: (0, 0))               # fetched once
    vec_spec = pl.BlockSpec((1, L), lambda i: (0, 0))
    cparams = pltpu.CompilerParams(dimension_semantics=("parallel",),
                                   vmem_limit_bytes=VMEM_LIMIT_BYTES)

    conv_flops = 2 * N * H * (3 * L) * L
    act_f32 = N * H * L * 4
    act_bf16 = N * H * L * 2
    w_bytes = 3 * L * L * 2
    stat_bytes = N * 2 * L * 4

    # ---- pass 1: conv1 + per-image BN partial sums -------------------------------------
    y1, s1 = pl.pallas_call(
        conv_stats_kernel,
        grid=(N,),
        in_specs=[act_spec, wmat_spec],
        out_specs=[act_spec, stat_spec],
        out_shape=(jax.ShapeDtypeStruct((N, H, L), jnp.float32),
                   jax.ShapeDtypeStruct((N, 2, L), jnp.float32)),
        compiler_params=cparams,
        cost_estimate=pl.CostEstimate(
            flops=conv_flops, transcendentals=0,
            bytes_accessed=act_bf16 + w_bytes + act_f32 + stat_bytes),
    )(x_bf16, w1p)

    sc1, sh1 = _bn_scale_shift(s1, g1, b1, count, W, C)

    # ---- pass 2: bn1 + relu + conv2 + per-image BN partial sums -------------------------
    y2, s2 = pl.pallas_call(
        bn_relu_conv_stats_kernel,
        grid=(N,),
        in_specs=[act_spec, vec_spec, vec_spec, wmat_spec],
        out_specs=[act_spec, stat_spec],
        out_shape=(jax.ShapeDtypeStruct((N, H, L), jnp.float32),
                   jax.ShapeDtypeStruct((N, 2, L), jnp.float32)),
        compiler_params=cparams,
        cost_estimate=pl.CostEstimate(
            flops=conv_flops + 4 * N * H * L, transcendentals=0,
            bytes_accessed=2 * act_f32 + w_bytes + stat_bytes + 2 * L * 4),
    )(y1, sc1, sh1, w2p)

    sc2, sh2 = _bn_scale_shift(s2, g2, b2, count, W, C)

    # ---- pass 3: bn2 + residual add + relu ----------------------------------------------
    out = pl.pallas_call(
        bn_add_relu_kernel,
        grid=(N,),
        in_specs=[act_spec, act_spec, vec_spec, vec_spec],
        out_specs=act_spec,
        out_shape=jax.ShapeDtypeStruct((N, H, L), jnp.float32),
        compiler_params=cparams,
        cost_estimate=pl.CostEstimate(
            flops=4 * N * H * L, transcendentals=0,
            bytes_accessed=2 * act_f32 + act_bf16 + 2 * L * 4),
    )(y2, x_bf16, sc2, sh2)

    return jnp.transpose(out.reshape(N, H, W, C), (0, 3, 1, 2))          # back to NCHW


# ----------------------------- pure-JAX reference (PyTorch f32 semantics) -----------------


def reference_forward(x_nchw, w1_oihw, g1, b1, w2_oihw, g2, b2):
    def conv(x, w):
        return jax.lax.conv_general_dilated(
            x, w, window_strides=(1, 1), padding=((1, 1), (1, 1)),
            dimension_numbers=("NCHW", "OIHW", "NCHW"))

    def bn(x, g, b):
        mean = x.mean(axis=(0, 2, 3), keepdims=True)
        var = ((x - mean) ** 2).mean(axis=(0, 2, 3), keepdims=True)
        xn = (x - mean) * jax.lax.rsqrt(var + EPS)
        return xn * g.reshape(1, -1, 1, 1) + b.reshape(1, -1, 1, 1)

    out = jax.nn.relu(bn(conv(x_nchw, w1_oihw), g1, b1))
    out = bn(conv(out, w2_oihw), g2, b2)
    return jax.nn.relu(out + x_nchw)


if __name__ == "__main__":
    # in_channels == out_channels, stride=1, downsample=None; W*C = 128 -> lane-dense packing.
    N, C, H, W = 2, 8, 16, 16
    key = jax.random.PRNGKey(0)
    kx_, kw1, kw2, kg1, kb1, kg2, kb2 = jax.random.split(key, 7)

    def bf16_exact(a):
        # Quantise test data to bf16-representable values so the harness isolates kernel
        # correctness (bf16 MXU operands, f32 accumulation) from operand-quantisation error
        # against the exact f32 reference.  Arbitrary f32 inputs incur ~1e-2-level extra
        # relative error from the bf16 operand cast, standard for mixed-precision ResNets.
        return a.astype(jnp.bfloat16).astype(jnp.float32)

    x = bf16_exact(jax.random.normal(kx_, (N, C, H, W), jnp.float32))
    wscale = 1.0 / np.sqrt(9 * C)
    w1 = bf16_exact(jax.random.normal(kw1, (C, C, 3, 3), jnp.float32) * wscale)   # OIHW
    w2 = bf16_exact(jax.random.normal(kw2, (C, C, 3, 3), jnp.float32) * wscale)   # OIHW
    g1 = 1.0 + 0.1 * jax.random.normal(kg1, (C,), jnp.float32)
    b1 = 0.1 * jax.random.normal(kb1, (C,), jnp.float32)
    g2 = 1.0 + 0.1 * jax.random.normal(kg2, (C,), jnp.float32)
    b2 = 0.1 * jax.random.normal(kb2, (C,), jnp.float32)

    out = jax.block_until_ready(residual_block(x, w1, g1, b1, w2, g2, b2))
    ref = jax.block_until_ready(reference_forward(x, w1, g1, b1, w2, g2, b2))
    np.testing.assert_allclose(np.asarray(out), np.asarray(ref), rtol=1e-2, atol=1e-2)

    print("KERNEL_OK")
</pallas_src>

<mosaic_0001>
module attributes {stable_mosaic.version = 11 : i64} {
  func.func @conv_stats_kernel(%arg0: i32, %arg1: memref<1x16x128xbf16, #tpu.memory_space<vmem>>, %arg2: memref<384x128xbf16, #tpu.memory_space<vmem>>, %arg3: memref<1x16x128xf32, #tpu.memory_space<vmem>>, %arg4: memref<1x2x128xf32, #tpu.memory_space<vmem>>) attributes {dimension_semantics = [#tpu.dimension_semantics<parallel>], iteration_bounds = array<i64: 2>, scalar_prefetch = 0 : i64, scratch_operands = 0 : i64, tpu.core_type = #tpu.core_type<tc>, window_params = [{transform_indices = @transform_0, window_bounds = array<i64: 1, 16, 128>}, {pipeline_mode = #tpu.pipeline_mode<synchronous>, transform_indices = @transform_1, window_bounds = array<i64: 384, 128>}, {transform_indices = @transform_2, window_bounds = array<i64: 1, 16, 128>}, {transform_indices = @transform_3, window_bounds = array<i64: 1, 2, 128>}]} {
    %c0 = arith.constant 0 : index
    %c0_0 = arith.constant 0 : index
    %c0_1 = arith.constant 0 : index
    %0 = vector.load %arg1[%c0, %c0_0, %c0_1] : memref<1x16x128xbf16, #tpu.memory_space<vmem>>, vector<1x16x128xbf16>
    %1 = vector.shape_cast %0 : vector<1x16x128xbf16> to vector<16x128xbf16>
    %cst = arith.constant 0.000000e+00 : bf16
    %2 = vector.broadcast %cst : bf16 to vector<1x128xbf16>
    %3 = vector.extract_strided_slice %1 {offsets = [0, 0], sizes = [15, 128], strides = [1, 1]} : vector<16x128xbf16> to vector<15x128xbf16>
    %4 = tpu.concatenate %2, %3 in 0 : vector<1x128xbf16>, vector<15x128xbf16> -> vector<16x128xbf16>
    %5 = vector.extract_strided_slice %1 {offsets = [1, 0], sizes = [15, 128], strides = [1, 1]} : vector<16x128xbf16> to vector<15x128xbf16>
    %6 = tpu.concatenate %5, %2 in 0 : vector<15x128xbf16>, vector<1x128xbf16> -> vector<16x128xbf16>
    %7 = tpu.concatenate %4, %1, %6 in 1 : vector<16x128xbf16>, vector<16x128xbf16>, vector<16x128xbf16> -> vector<16x384xbf16>
    %c0_2 = arith.constant 0 : index
    %c0_3 = arith.constant 0 : index
    %8 = vector.load %arg2[%c0_2, %c0_3] : memref<384x128xbf16, #tpu.memory_space<vmem>>, vector<384x128xbf16>
    %cst_4 = arith.constant dense<0.000000e+00> : vector<16x128xf32>
    %9 = tpu.matmul %7, %8, %cst_4 {dimension_numbers = #tpu.dot_dimension_numbers<[1], [0], [0], [1], [0, 0, 1, 1], [], []>} : vector<16x384xbf16>, vector<384x128xbf16>, vector<16x128xf32> -> vector<16x128xf32>
    %c0_5 = arith.constant 0 : index
    %c0_6 = arith.constant 0 : index
    %c0_7 = arith.constant 0 : index
    %10 = vector.load %arg3[%c0_5, %c0_6, %c0_7] : memref<1x16x128xf32, #tpu.memory_space<vmem>>, vector<1x16x128xf32>
    %11 = vector.shape_cast %10 : vector<1x16x128xf32> to vector<16x128xf32>
    %12 = vector.shape_cast %9 : vector<16x128xf32> to vector<1x16x128xf32>
    tpu.vector_store %arg3[%c0_5, %c0_6, %c0_7], %12 {strides = array<i32>} : memref<1x16x128xf32, #tpu.memory_space<vmem>>, vector<1x16x128xf32>,
    %cst_8 = arith.constant dense<0.000000e+00> : vector<128xf32>
    %13 = vector.multi_reduction <add>, %9, %cst_8 [0] : vector<16x128xf32> to vector<128xf32>
    %14 = vector.shape_cast %13 : vector<128xf32> to vector<1x128xf32>
    %15 = arith.mulf %9, %9 : vector<16x128xf32>
    %cst_9 = arith.constant dense<0.000000e+00> : vector<128xf32>
    %16 = vector.multi_reduction <add>, %15, %cst_9 [0] : vector<16x128xf32> to vector<128xf32>
    %17 = vector.shape_cast %16 : vector<128xf32> to vector<1x128xf32>
    %18 = tpu.concatenate %14, %17 in 0 : vector<1x128xf32>, vector<1x128xf32> -> vector<2x128xf32>
    %c0_10 = arith.constant 0 : index
    %c0_11 = arith.constant 0 : index
    %c0_12 = arith.constant 0 : index
    %19 = vector.load %arg4[%c0_10, %c0_11, %c0_12] : memref<1x2x128xf32, #tpu.memory_space<vmem>>, vector<1x2x128xf32>
    %20 = vector.shape_cast %19 : vector<1x2x128xf32> to vector<2x128xf32>
    %21 = vector.shape_cast %18 : vector<2x128xf32> to vector<1x2x128xf32>
    tpu.vector_store %arg4[%c0_10, %c0_11, %c0_12], %21 {strides = array<i32>} : memref<1x2x128xf32, #tpu.memory_space<vmem>>, vector<1x2x128xf32>,
    return
  }
  func.func @transform_0(%arg0: i32) -> (i32, i32, i32) {
    %c0_i32 = arith.constant 0 : i32
    %c0_i32_0 = arith.constant 0 : i32
    %c0_i32_1 = arith.constant 0 : i32
    return %arg0, %c0_i32, %c0_i32_0 : i32, i32, i32
  }
  func.func @transform_1(%arg0: i32) -> (i32, i32) {
    %c0_i32 = arith.constant 0 : i32
    %c0_i32_0 = arith.constant 0 : i32
    %c0_i32_1 = arith.constant 0 : i32
    return %c0_i32, %c0_i32_0 : i32, i32
  }
  func.func @transform_2(%arg0: i32) -> (i32, i32, i32) {
    %c0_i32 = arith.constant 0 : i32
    %c0_i32_0 = arith.constant 0 : i32
    %c0_i32_1 = arith.constant 0 : i32
    return %arg0, %c0_i32, %c0_i32_0 : i32, i32, i32
  }
  func.func @transform_3(%arg0: i32) -> (i32, i32, i32) {
    %c0_i32 = arith.constant 0 : i32
    %c0_i32_0 = arith.constant 0 : i32
    %c0_i32_1 = arith.constant 0 : i32
    return %arg0, %c0_i32, %c0_i32_0 : i32, i32, i32
  }
}

module attributes {stable_mosaic.version = 11 : i64} {
  func.func @bn_relu_conv_stats_kernel(%arg0: i32, %arg1: memref<1x16x128xf32, #tpu.memory_space<vmem>>, %arg2: memref<1x128xf32, #tpu.memory_space<vmem>>, %arg3: memref<1x128xf32, #tpu.memory_space<vmem>>, %arg4: memref<384x128xbf16, #tpu.memory_space<vmem>>, %arg5: memref<1x16x128xf32, #tpu.memory_space<vmem>>, %arg6: memref<1x2x128xf32, #tpu.memory_space<vmem>>) attributes {dimension_semantics = [#tpu.dimension_semantics<parallel>], iteration_bounds = array<i64: 2>, scalar_prefetch = 0 : i64, scratch_operands = 0 : i64, tpu.core_type = #tpu.core_type<tc>, window_params = [{transform_indices = @transform_0, window_bounds = array<i64: 1, 16, 128>}, {pipeline_mode = #tpu.pipeline_mode<synchronous>, transform_indices = @transform_1, window_bounds = array<i64: 1, 128>}, {pipeline_mode = #tpu.pipeline_mode<synchronous>, transform_indices = @transform_2, window_bounds = array<i64: 1, 128>}, {pipeline_mode = #tpu.pipeline_mode<synchronous>, transform_indices = @transform_3, window_bounds = array<i64: 384, 128>}, {transform_indices = @transform_4, window_bounds = array<i64: 1, 16, 128>}, {transform_indices = @transform_5, window_bounds = array<i64: 1, 2, 128>}]} {
    %c0 = arith.constant 0 : index
    %c0_0 = arith.constant 0 : index
    %c0_1 = arith.constant 0 : index
    %0 = vector.load %arg1[%c0, %c0_0, %c0_1] : memref<1x16x128xf32, #tpu.memory_space<vmem>>, vector<1x16x128xf32>
    %1 = vector.shape_cast %0 : vector<1x16x128xf32> to vector<16x128xf32>
    %c0_2 = arith.constant 0 : index
    %c0_3 = arith.constant 0 : index
    %2 = vector.load %arg2[%c0_2, %c0_3] : memref<1x128xf32, #tpu.memory_space<vmem>>, vector<1x128xf32>
    %3 = vector.broadcast %2 : vector<1x128xf32> to vector<16x128xf32>
    %4 = arith.mulf %1, %3 : vector<16x128xf32>
    %c0_4 = arith.constant 0 : index
    %c0_5 = arith.constant 0 : index
    %5 = vector.load %arg3[%c0_4, %c0_5] : memref<1x128xf32, #tpu.memory_space<vmem>>, vector<1x128xf32>
    %6 = vector.broadcast %5 : vector<1x128xf32> to vector<16x128xf32>
    %7 = arith.addf %4, %6 : vector<16x128xf32>
    %cst = arith.constant 0.000000e+00 : f32
    %8 = vector.broadcast %cst : f32 to vector<16x128xf32>
    %9 = arith.maximumf %7, %8 : vector<16x128xf32>
    %10 = arith.truncf %9 : vector<16x128xf32> to vector<16x128xbf16>
    %cst_6 = arith.constant 0.000000e+00 : bf16
    %11 = vector.broadcast %cst_6 : bf16 to vector<1x128xbf16>
    %12 = vector.extract_strided_slice %10 {offsets = [0, 0], sizes = [15, 128], strides = [1, 1]} : vector<16x128xbf16> to vector<15x128xbf16>
    %13 = tpu.concatenate %11, %12 in 0 : vector<1x128xbf16>, vector<15x128xbf16> -> vector<16x128xbf16>
    %14 = vector.extract_strided_slice %10 {offsets = [1, 0], sizes = [15, 128], strides = [1, 1]} : vector<16x128xbf16> to vector<15x128xbf16>
    %15 = tpu.concatenate %14, %11 in 0 : vector<15x128xbf16>, vector<1x128xbf16> -> vector<16x128xbf16>
    %16 = tpu.concatenate %13, %10, %15 in 1 : vector<16x128xbf16>, vector<16x128xbf16>, vector<16x128xbf16> -> vector<16x384xbf16>
    %c0_7 = arith.constant 0 : index
    %c0_8 = arith.constant 0 : index
    %17 = vector.load %arg4[%c0_7, %c0_8] : memref<384x128xbf16, #tpu.memory_space<vmem>>, vector<384x128xbf16>
    %cst_9 = arith.constant dense<0.000000e+00> : vector<16x128xf32>
    %18 = tpu.matmul %16, %17, %cst_9 {dimension_numbers = #tpu.dot_dimension_numbers<[1], [0], [0], [1], [0, 0, 1, 1], [], []>} : vector<16x384xbf16>, vector<384x128xbf16>, vector<16x128xf32> -> vector<16x128xf32>
    %c0_10 = arith.constant 0 : index
    %c0_11 = arith.constant 0 : index
    %c0_12 = arith.constant 0 : index
    %19 = vector.load %arg5[%c0_10, %c0_11, %c0_12] : memref<1x16x128xf32, #tpu.memory_space<vmem>>, vector<1x16x128xf32>
    %20 = vector.shape_cast %19 : vector<1x16x128xf32> to vector<16x128xf32>
    %21 = vector.shape_cast %18 : vector<16x128xf32> to vector<1x16x128xf32>
    tpu.vector_store %arg5[%c0_10, %c0_11, %c0_12], %21 {strides = array<i32>} : memref<1x16x128xf32, #tpu.memory_space<vmem>>, vector<1x16x128xf32>,
    %cst_13 = arith.constant dense<0.000000e+00> : vector<128xf32>
    %22 = vector.multi_reduction <add>, %18, %cst_13 [0] : vector<16x128xf32> to vector<128xf32>
    %23 = vector.shape_cast %22 : vector<128xf32> to vector<1x128xf32>
    %24 = arith.mulf %18, %18 : vector<16x128xf32>
    %cst_14 = arith.constant dense<0.000000e+00> : vector<128xf32>
    %25 = vector.multi_reduction <add>, %24, %cst_14 [0] : vector<16x128xf32> to vector<128xf32>
    %26 = vector.shape_cast %25 : vector<128xf32> to vector<1x128xf32>
    %27 = tpu.concatenate %23, %26 in 0 : vector<1x128xf32>, vector<1x128xf32> -> vector<2x128xf32>
    %c0_15 = arith.constant 0 : index
    %c0_16 = arith.constant 0 : index
    %c0_17 = arith.constant 0 : index
    %28 = vector.load %arg6[%c0_15, %c0_16, %c0_17] : memref<1x2x128xf32, #tpu.memory_space<vmem>>, vector<1x2x128xf32>
    %29 = vector.shape_cast %28 : vector<1x2x128xf32> to vector<2x128xf32>
    %30 = vector.shape_cast %27 : vector<2x128xf32> to vector<1x2x128xf32>
    tpu.vector_store %arg6[%c0_15, %c0_16, %c0_17], %30 {strides = array<i32>} : memref<1x2x128xf32, #tpu.memory_space<vmem>>, vector<1x2x128xf32>,
    return
  }
  func.func @transform_0(%arg0: i32) -> (i32, i32, i32) {
    %c0_i32 = arith.constant 0 : i32
    %c0_i32_0 = arith.constant 0 : i32
    %c0_i32_1 = arith.constant 0 : i32
    return %arg0, %c0_i32, %c0_i32_0 : i32, i32, i32
  }
  func.func @transform_1(%arg0: i32) -> (i32, i32) {
    %c0_i32 = arith.constant 0 : i32
    %c0_i32_0 = arith.constant 0 : i32
    %c0_i32_1 = arith.constant 0 : i32
    return %c0_i32, %c0_i32_0 : i32, i32
  }
  func.func @transform_2(%arg0: i32) -> (i32, i32) {
    %c0_i32 = arith.constant 0 : i32
    %c0_i32_0 = arith.constant 0 : i32
    %c0_i32_1 = arith.constant 0 : i32
    return %c0_i32, %c0_i32_0 : i32, i32
  }
  func.func @transform_3(%arg0: i32) -> (i32, i32) {
    %c0_i32 = arith.constant 0 : i32
    %c0_i32_0 = arith.constant 0 : i32
    %c0_i32_1 = arith.constant 0 : i32
    return %c0_i32, %c0_i32_0 : i32, i32
  }
  func.func @transform_4(%arg0: i32) -> (i32, i32, i32) {
    %c0_i32 = arith.constant 0 : i32
    %c0_i32_0 = arith.constant 0 : i32
    %c0_i32_1 = arith.constant 0 : i32
    return %arg0, %c0_i32, %c0_i32_0 : i32, i32, i32
  }
  func.func @transform_5(%arg0: i32) -> (i32, i32, i32) {
    %c0_i32 = arith.constant 0 : i32
    %c0_i32_0 = arith.constant 0 : i32
    %c0_i32_1 = arith.constant 0 : i32
    return %arg0, %c0_i32, %c0_i32_0 : i32, i32, i32
  }
}

module attributes {stable_mosaic.version = 11 : i64} {
  func.func @bn_add_relu_kernel(%arg0: i32, %arg1: memref<1x16x128xf32, #tpu.memory_space<vmem>>, %arg2: memref<1x16x128xbf16, #tpu.memory_space<vmem>>, %arg3: memref<1x128xf32, #tpu.memory_space<vmem>>, %arg4: memref<1x128xf32, #tpu.memory_space<vmem>>, %arg5: memref<1x16x128xf32, #tpu.memory_space<vmem>>) attributes {dimension_semantics = [#tpu.dimension_semantics<parallel>], iteration_bounds = array<i64: 2>, scalar_prefetch = 0 : i64, scratch_operands = 0 : i64, tpu.core_type = #tpu.core_type<tc>, window_params = [{transform_indices = @transform_0, window_bounds = array<i64: 1, 16, 128>}, {transform_indices = @transform_1, window_bounds = array<i64: 1, 16, 128>}, {pipeline_mode = #tpu.pipeline_mode<synchronous>, transform_indices = @transform_2, window_bounds = array<i64: 1, 128>}, {pipeline_mode = #tpu.pipeline_mode<synchronous>, transform_indices = @transform_3, window_bounds = array<i64: 1, 128>}, {transform_indices = @transform_4, window_bounds = array<i64: 1, 16, 128>}]} {
    %c0 = arith.constant 0 : index
    %c0_0 = arith.constant 0 : index
    %c0_1 = arith.constant 0 : index
    %0 = vector.load %arg2[%c0, %c0_0, %c0_1] : memref<1x16x128xbf16, #tpu.memory_space<vmem>>, vector<1x16x128xbf16>
    %1 = vector.shape_cast %0 : vector<1x16x128xbf16> to vector<16x128xbf16>
    %2 = arith.extf %1 : vector<16x128xbf16> to vector<16x128xf32>
    %c0_2 = arith.constant 0 : index
    %c0_3 = arith.constant 0 : index
    %c0_4 = arith.constant 0 : index
    %3 = vector.load %arg1[%c0_2, %c0_3, %c0_4] : memref<1x16x128xf32, #tpu.memory_space<vmem>>, vector<1x16x128xf32>
    %4 = vector.shape_cast %3 : vector<1x16x128xf32> to vector<16x128xf32>
    %c0_5 = arith.constant 0 : index
    %c0_6 = arith.constant 0 : index
    %5 = vector.load %arg3[%c0_5, %c0_6] : memref<1x128xf32, #tpu.memory_space<vmem>>, vector<1x128xf32>
    %6 = vector.broadcast %5 : vector<1x128xf32> to vector<16x128xf32>
    %7 = arith.mulf %4, %6 : vector<16x128xf32>
    %c0_7 = arith.constant 0 : index
    %c0_8 = arith.constant 0 : index
    %8 = vector.load %arg4[%c0_7, %c0_8] : memref<1x128xf32, #tpu.memory_space<vmem>>, vector<1x128xf32>
    %9 = vector.broadcast %8 : vector<1x128xf32> to vector<16x128xf32>
    %10 = arith.addf %7, %9 : vector<16x128xf32>
    %11 = arith.addf %10, %2 : vector<16x128xf32>
    %cst = arith.constant 0.000000e+00 : f32
    %12 = vector.broadcast %cst : f32 to vector<16x128xf32>
    %13 = arith.maximumf %11, %12 : vector<16x128xf32>
    %c0_9 = arith.constant 0 : index
    %c0_10 = arith.constant 0 : index
    %c0_11 = arith.constant 0 : index
    %14 = vector.load %arg5[%c0_9, %c0_10, %c0_11] : memref<1x16x128xf32, #tpu.memory_space<vmem>>, vector<1x16x128xf32>
    %15 = vector.shape_cast %14 : vector<1x16x128xf32> to vector<16x128xf32>
    %16 = vector.shape_cast %13 : vector<16x128xf32> to vector<1x16x128xf32>
    tpu.vector_store %arg5[%c0_9, %c0_10, %c0_11], %16 {strides = array<i32>} : memref<1x16x128xf32, #tpu.memory_space<vmem>>, vector<1x16x128xf32>,
    return
  }
  func.func @transform_0(%arg0: i32) -> (i32, i32, i32) {
    %c0_i32 = arith.constant 0 : i32
    %c0_i32_0 = arith.constant 0 : i32
    %c0_i32_1 = arith.constant 0 : i32
    return %arg0, %c0_i32, %c0_i32_0 : i32, i32, i32
  }
  func.func @transform_1(%arg0: i32) -> (i32, i32, i32) {
    %c0_i32 = arith.constant 0 : i32
    %c0_i32_0 = arith.constant 0 : i32
    %c0_i32_1 = arith.constant 0 : i32
    return %arg0, %c0_i32, %c0_i32_0 : i32, i32, i32
  }
  func.func @transform_2(%arg0: i32) -> (i32, i32) {
    %c0_i32 = arith.constant 0 : i32
    %c0_i32_0 = arith.constant 0 : i32
    %c0_i32_1 = arith.constant 0 : i32
    return %c0_i32, %c0_i32_0 : i32, i32
  }
  func.func @transform_3(%arg0: i32) -> (i32, i32) {
    %c0_i32 = arith.constant 0 : i32
    %c0_i32_0 = arith.constant 0 : i32
    %c0_i32_1 = arith.constant 0 : i32
    return %c0_i32, %c0_i32_0 : i32, i32
  }
  func.func @transform_4(%arg0: i32) -> (i32, i32, i32) {
    %c0_i32 = arith.constant 0 : i32
    %c0_i32_0 = arith.constant 0 : i32
    %c0_i32_1 = arith.constant 0 : i32
    return %arg0, %c0_i32, %c0_i32_0 : i32, i32, i32
  }
}

</mosaic_0001>

<llo_original>
// kernel: tile.23
$region0: #{tile.23}
  #allocation0 [shape = 's32[1]{0}', space=sflag, size = 0x4, scoped, tag = 'scoped memory for tile.23']
  %s0 = inlined_call_operand.vmem [shape: f32[8], index: 0, kind: input, shape index: {}]
  %s1 = inlined_call_operand.vmem [shape: f32[16,8], index: 1, kind: output, shape index: {}]
  // Predicated region
  $region2: #{tile.23} parent=0 // pred_check
    _
  $region3: #{tile.23} parent=0 // pred_check_branch
    %3 = sbr.rel (0) target = $region5
  $region4: #{tile.23} parent=0 // pred_region
    _
  $region5: #{tile.23} parent=0 // pred_fallthru
    _
  %v4 = vld [vmem:[%s0] ss:$0 sm:$0xff]
  %5 = vst [vmem:[%s1] sm:$0xff] %v4
  %s6 = scalar_lea.vmem %s1, 8
  %7 = vst [vmem:[%s6] sm:$0xff] %v4

// kernel: tile.24
$region0: #{tile.24}
  %s0 = inlined_call_operand.vmem [shape: f32[16,8], index: 0, kind: input, shape index: {}]
  %s1 = inlined_call_operand.vmem [shape: f32[1,128], index: 1, kind: output, shape index: {}]
  $region1: #{tile.24} parent=0
    #allocation0 [shape = 'u8[4096]{0}', space=vmem, size = 0x1000, scoped, tag = 'scoped mem for output reshape']
    %v2 = vld [vmem:[%s0] sm:$0x1]
    %vm3 = vcmask 64512
    %4 = vst.msk [vmem:[#allocation0] sm:$0x1] %vm3, %v2
    %s5 = scalar_lea.vmem %s0, 15
    %v6 = vld [vmem:[%s5] sm:$0x1]
    %7 = vrot.lane.b32.xlu0 %v6, 120
    %v8 = vpop.permute.xlu0 %7
    %vm9 = vcmask 1048512
    %10 = vst.msk [vmem:[#allocation0] sm:$0x1] %vm9, %v8
    %s11 = scalar_lea.vmem %s0, 14
    %v12 = vld [vmem:[%s11] sm:$0x1]
    %13 = vrot.lane.b32.xlu0 %v12, 112
    %v14 = vpop.permute.xlu0 %13
    %vm15 = vcmask 982912
    %16 = vst.msk [vmem:[#allocation0] sm:$0x1] %vm15, %v14
    %s17 = scalar_lea.vmem %s0, 13
    %v18 = vld [vmem:[%s17] sm:$0x1]
    %19 = vrot.lane.b32.xlu0 %v18, 104
    %v20 = vpop.permute.xlu0 %19
    %vm21 = vcmask 917312
    %22 = vst.msk [vmem:[#allocation0] sm:$0x1] %vm21, %v20
    %s23 = scalar_lea.vmem %s0, 12
    %v24 = vld [vmem:[%s23] sm:$0x1]
    %25 = vrot.lane.b32.xlu0 %v24, 96
    %v26 = vpop.permute.xlu0 %25
    %vm27 = vcmask 851712
    %28 = vst.msk [vmem:[#allocation0] sm:$0x1] %vm27, %v26
    %s29 = scalar_lea.vmem %s0, 11
    %v30 = vld [vmem:[%s29] sm:$0x1]
    %31 = vrot.lane.b32.xlu0 %v30, 88
    %v32 = vpop.permute.xlu0 %31
    %vm33 = vcmask 786112
    %34 = vst.msk [vmem:[#allocation0] sm:$0x1] %vm33, %v32
    %s35 = scalar_lea.vmem %s0, 10
    %v36 = vld [vmem:[%s35] sm:$0x1]
    %37 = vrot.lane.b32.xlu0 %v36, 80
    %v38 = vpop.permute.xlu0 %37
    %vm39 = vcmask 720512
    %40 = vst.msk [vmem:[#allocation0] sm:$0x1] %vm39, %v38
    %s41 = scalar_lea.vmem %s0, 9
    %v42 = vld [vmem:[%s41] sm:$0x1]
    %43 = vrot.lane.b32.xlu0 %v42, 72
    %v44 = vpop.permute.xlu0 %43
    %vm45 = vcmask 654912
    %46 = vst.msk [vmem:[#allocation0] sm:$0x1] %vm45, %v44
    %s47 = scalar_lea.vmem %s0, 8
    %v48 = vld [vmem:[%s47] sm:$0x1]
    %49 = vrot.lane.b32.xlu0 %v48, 64
    %v50 = vpop.permute.xlu0 %49
    %vm51 = vcmask 589312
    %52 = vst.msk [vmem:[#allocation0] sm:$0x1] %vm51, %v50
    %s53 = scalar_lea.vmem %s0, 7
    %v54 = vld [vmem:[%s53] sm:$0x1]
    %55 = vrot.lane.b32.xlu0 %v54, 56
    %v56 = vpop.permute.xlu0 %55
    %vm57 = vcmask 523712
    %58 = vst.msk [vmem:[#allocation0] sm:$0x1] %vm57, %v56
    %s59 = scalar_lea.vmem %s0, 6
    %v60 = vld [vmem:[%s59] sm:$0x1]
    %61 = vrot.lane.b32.xlu0 %v60, 48
    %v62 = vpop.permute.xlu0 %61
    %vm63 = vcmask 458112
    %64 = vst.msk [vmem:[#allocation0] sm:$0x1] %vm63, %v62
    %s65 = scalar_lea.vmem %s0, 5
    %v66 = vld [vmem:[%s65] sm:$0x1]
    %67 = vrot.lane.b32.xlu0 %v66, 40
    %v68 = vpop.permute.xlu0 %67
    %vm69 = vcmask 392512
    %70 = vst.msk [vmem:[#allocation0] sm:$0x1] %vm69, %v68
    %s71 = scalar_lea.vmem %s0, 4
    %v72 = vld [vmem:[%s71] sm:$0x1]
    %73 = vrot.lane.b32.xlu0 %v72, 32
    %v74 = vpop.permute.xlu0 %73
    %vm75 = vcmask 326912
    %76 = vst.msk [vmem:[#allocation0] sm:$0x1] %vm75, %v74
    %s77 = scalar_lea.vmem %s0, 3
    %v78 = vld [vmem:[%s77] sm:$0x1]
    %79 = vrot.lane.b32.xlu0 %v78, 24
    %v80 = vpop.permute.xlu0 %79
    %vm81 = vcmask 261312
    %82 = vst.msk [vmem:[#allocation0] sm:$0x1] %vm81, %v80
    %s83 = scalar_lea.vmem %s0, 2
    %v84 = vld [vmem:[%s83] sm:$0x1]
    %85 = vrot.lane.b32.xlu0 %v84, 16
    %v86 = vpop.permute.xlu0 %85
    %vm87 = vcmask 195712
    %88 = vst.msk [vmem:[#allocation0] sm:$0x1] %vm87, %v86
    %s89 = scalar_lea.vmem %s0, 1
    %v90 = vld [vmem:[%s89] sm:$0x1]
    %91 = vrot.lane.b32.xlu0 %v90, 8
    %v92 = vpop.permute.xlu0 %91
    %vm93 = vcmask 130112
    %94 = vst.msk [vmem:[#allocation0] sm:$0x1] %vm93, %v92
    %s96 = sshll.u32 1, 1
    %s97 = ssub.s32 %s96, 1
    %v99 = vld [vmem:[#allocation0] sm:%s97]
    %s100 = sshll.u32 1, 1
    %s101 = ssub.s32 %s100, 1
    %102 = vst [vmem:[%s1] sm:%s101] %v99

// kernel: residual_block.3
$region0: #{residual_block.3}
  #allocation0 [shape = 'u32[]', space=smem, size = 0x4, offset = 0x4, fixed_abs, tag = 'smem constant byte address 0x4 - core index']
  #allocation1 [shape = 'u32[144,128]{1,0:T(1,128)}', space=vmem, size = 0x12000, scoped, tag = 'internal scratch']
  %s0 = inlined_call_operand.vmem [shape: bf16[2,16,128], index: 0, kind: input, shape index: {}]
  %s1 = inlined_call_operand.vmem [shape: bf16[384,128], index: 1, kind: input, shape index: {}]
  %s2 = inlined_call_operand.vmem [shape: f32[2,16,128], index: 2, kind: output, shape index: {0}]
  %s3 = inlined_call_operand.vmem [shape: f32[2,2,128], index: 3, kind: output, shape index: {1}]
  %4 = xla_tuple %s2, %s3
  %s5 = sld [smem:[#allocation0]]
  $region49: #{residual_block.3} parent=0
    _
  %s7 = ssub.s32 1, %s5
  %s8 = scalar_select 0, %s7, %s5
  loop: start=0, step=1, limit=4
  $region2: #{residual_block.3} parent=0 // loop_pre_header
    _
  $region3: #{residual_block.3} parent=0 // loop_header
    %s10 = sphi 0, %s14
    %p11 = scmp.ge.s32.totalorder %s10, 4
    %s20 = sphi 0, %s22
    %s23 = sphi 0, %s20
    %s24 = sphi 0, %s23
    %s40 = sphi 0, %s24
    %s44 = sphi 0, %s44
    %s46 = sphi 0, %s44
    %s47 = sphi 0, %s46
    %s61 = sphi 0, %s47
    %s67 = sphi 0, %s69
    %s70 = sphi 0, %s67
    %s71 = sphi 0, %s70
    %s87 = sphi 0, %s71
    %s93 = sphi 0, %s95
    %s96 = sphi 0, %s93
    %s97 = sphi 0, %s96
    %s113 = sphi 0, %s97
  $region4: #{residual_block.3} parent=0 // loop_header_branch
    %13 = sbr.rel (%p11) target = $region8
  $region5: #{residual_block.3} parent=0 // loop_body
    %s15 = ssub.s32 %s10, 1
    %s16 = ssub.s32 %s10, 2
    %s17 = sadd.s32 %s10, 1
    %s18 = ssub.s32 %s10, %s17
    %p19 = scmp.eq.s32.totalorder %s18, 0
    %s21 = sadd.s32 %s20, 1
    %s22 = scalar_select %p19, %s20, %s21
    %p25 = pneg %p19
    %p26 = scmp.eq.s32.totalorder %s10, 1
    %p27 = por %p25, %p26
    %p28 = scmp.ne.s32.totalorder %s20, %s23
    %p29 = scmp.eq.s32.totalorder %s10, 0
    %p30 = por %p28, %p29
    %p31 = scmp.ne.s32.totalorder %s20, %s23
    %p32 = scmp.eq.s32.totalorder %s15, 1
    %p33 = por %p31, %p32
    %p34 = scmp.ne.s32.totalorder %s23, %s24
    %p35 = scmp.eq.s32.totalorder %s15, 0
    %p36 = por %p34, %p35
    %p37 = scmp.ne.s32.totalorder %s23, %s24
    %p38 = scmp.eq.s32.totalorder %s16, 1
    %p39 = por %p37, %p38
    %p41 = scmp.ne.s32.totalorder %s24, %s40
    %p42 = scmp.eq.s32.totalorder %s16, 0
    %p43 = por %p41, %p42
    %s45 = sadd.s32 %s44, 1
    %p48 = scmp.eq.s32.totalorder %s10, 1
    %p49 = scmp.ne.s32.totalorder %s44, %s46
    %p50 = scmp.eq.s32.totalorder %s10, 0
    %p51 = por %p49, %p50
    %p52 = scmp.ne.s32.totalorder %s44, %s46
    %p53 = scmp.eq.s32.totalorder %s15, 1
    %p54 = por %p52, %p53
    %p55 = scmp.ne.s32.totalorder %s46, %s47
    %p56 = scmp.eq.s32.totalorder %s15, 0
    %p57 = por %p55, %p56
    %p58 = scmp.ne.s32.totalorder %s46, %s47
    %p59 = scmp.eq.s32.totalorder %s16, 1
    %p60 = por %p58, %p59
    %p62 = scmp.ne.s32.totalorder %s47, %s61
    %p63 = scmp.eq.s32.totalorder %s16, 0
    %p64 = por %p62, %p63
    %s65 = ssub.s32 %s10, %s17
    %p66 = scmp.eq.s32.totalorder %s65, 0
    %s68 = sadd.s32 %s67, 1
    %s69 = scalar_select %p66, %s67, %s68
    %p72 = pneg %p66
    %p73 = scmp.eq.s32.totalorder %s10, 1
    %p74 = por %p72, %p73
    %p75 = scmp.ne.s32.totalorder %s67, %s70
    %p76 = scmp.eq.s32.totalorder %s10, 0
    %p77 = por %p75, %p76
    %p78 = scmp.ne.s32.totalorder %s67, %s70
    %p79 = scmp.eq.s32.totalorder %s15, 1
    %p80 = por %p78, %p79
    %p81 = scmp.ne.s32.totalorder %s70, %s71
    %p82 = scmp.eq.s32.totalorder %s15, 0
    %p83 = por %p81, %p82
    %p84 = scmp.ne.s32.totalorder %s70, %s71
    %p85 = scmp.eq.s32.totalorder %s16, 1
    %p86 = por %p84, %p85
    %p88 = scmp.ne.s32.totalorder %s71, %s87
    %p89 = scmp.eq.s32.totalorder %s16, 0
    %p90 = por %p88, %p89
    %s91 = ssub.s32 %s10, %s17
    %p92 = scmp.eq.s32.totalorder %s91, 0
    %s94 = sadd.s32 %s93, 1
    %s95 = scalar_select %p92, %s93, %s94
    %p98 = pneg %p92
    %p99 = scmp.eq.s32.totalorder %s10, 1
    %p100 = por %p98, %p99
    %p101 = scmp.ne.s32.totalorder %s93, %s96
    %p102 = scmp.eq.s32.totalorder %s10, 0
    %p103 = por %p101, %p102
    %p104 = scmp.ne.s32.totalorder %s93, %s96
    %p105 = scmp.eq.s32.totalorder %s15, 1
    %p106 = por %p104, %p105
    %p107 = scmp.ne.s32.totalorder %s96, %s97
    %p108 = scmp.eq.s32.totalorder %s15, 0
    %p109 = por %p107, %p108
    %p110 = scmp.ne.s32.totalorder %s96, %s97
    %p111 = scmp.eq.s32.totalorder %s16, 1
    %p112 = por %p110, %p111
    %p114 = scmp.ne.s32.totalorder %s97, %s113
    %p115 = scmp.eq.s32.totalorder %s16, 0
    %p116 = por %p114, %p115
    %p117 = scmp.le.s32.totalorder 1, %s10
    %p118 = scmp.lt.s32.totalorder %s10, 3
    %p119 = pnand %p117, %p118
    %p120 = pneg %p119
    // Predicated region
    $region9: #{residual_block.3} parent=5 // pred_check
      _
    $region10: #{residual_block.3} parent=5 // pred_check_branch
      %122 = sbr.rel (%p119) target = $region12
    $region11: #{residual_block.3} parent=5 // pred_region
      %s123 = ssub.s32 %s10, 1
      // Predicated region
      $region13: #{residual_block.3} parent=11 // pred_check
        %p124 = pneg %p57
      $region14: #{residual_block.3} parent=11 // pred_check_branch
        %126 = sbr.rel (%p124) target = $region16
      $region15: #{residual_block.3} parent=11 // pred_region
        _
      $region16: #{residual_block.3} parent=11 // pred_fallthru
        _
    $region12: #{residual_block.3} parent=5 // pred_fallthru
      _
    %p127 = scmp.lt.s32.totalorder %s10, 2
    // Predicated region
    $region17: #{residual_block.3} parent=5 // pred_check
      %p128 = pneg %p127
    $region18: #{residual_block.3} parent=5 // pred_check_branch
      %130 = sbr.rel (%p128) target = $region20
    $region19: #{residual_block.3} parent=5 // pred_region
      // Predicated region
      $region21: #{residual_block.3} parent=19 // pred_check
        %p131 = pneg %p30
      $region22: #{residual_block.3} parent=19 // pred_check_branch
        %133 = sbr.rel (%p131) target = $region24
      $region23: #{residual_block.3} parent=19 // pred_region
        %p134 = scmp.lt.s32.totalorder %s10, 1
        %s135 = scalar_select %p134, %s10, 1
        %s136 = smul.addr %s135, 2
        %s137 = smul.addr %s136, 4
        %s138 = scalar_lea.vmem %s0, %s137
      $region24: #{residual_block.3} parent=19 // pred_fallthru
        _
    $region20: #{residual_block.3} parent=5 // pred_fallthru
      _
    %p139 = scmp.le.s32.totalorder 1, %s10
    %p140 = scmp.lt.s32.totalorder %s10, 3
    %p141 = pnand %p139, %p140
    %p142 = pneg %p141
    // Predicated region
    $region25: #{residual_block.3} parent=5 // pred_check
      _
    $region26: #{residual_block.3} parent=5 // pred_check_branch
      %144 = sbr.rel (%p141) target = $region28
    $region27: #{residual_block.3} parent=5 // pred_region
      %s145 = ssub.s32 %s10, 1
      %p146 = scmp.lt.s32.totalorder %s15, 1
      %s147 = scalar_select %p146, %s15, 1
      %s148 = smul.addr %s147, 2
      %s149 = smul.addr %s148, 4
      %s150 = scalar_lea.vmem %s0, %s149
      %p151 = pneg %p36
      %p152 = pneg %p33
      %p153 = pneg %p57
      %p154 = pneg %p54
      %p155 = pneg %p83
      %p156 = pneg %p80
      %p157 = scmp.lt.s32.totalorder %s15, 1
      %s158 = scalar_select %p157, %s15, 1
      %s159 = smul.addr %s158, 2
      %s160 = smul.addr %s159, 8
      %s161 = scalar_lea.vmem %s2, %s160
      %p162 = pneg %p109
      %p163 = pneg %p106
      %p164 = scmp.lt.s32.totalorder %s15, 1
      %s165 = scalar_select %p164, %s15, 1
      %s166 = smul.addr %s165, 2
      %s167 = scalar_lea.vmem %s3, %s166
      %p168 = scmp.lt.s32.totalorder %s15, 1
      %s169 = scalar_select %p168, %s15, 1
      %s170 = smul.addr %s169, 2
      %s171 = smul.addr %s170, 4
      %s172 = scalar_lea.vmem %s0, %s171
      %p173 = scmp.lt.s32.totalorder %s15, 1
      %s174 = scalar_select %p173, %s15, 1
      %s175 = smul.addr %s174, 2
      %s176 = smul.addr %s175, 8
      %s177 = scalar_lea.vmem %s2, %s176
      %p178 = scmp.lt.s32.totalorder %s15, 1
      %s179 = scalar_select %p178, %s15, 1
      %s180 = smul.addr %s179, 2
      %s181 = scalar_lea.vmem %s3, %s180
      %v183 = vld [vmem:[%s172] sm:$0xf]
      %v184 = vld [vmem:[%s172 + $0x4] sm:$0xf]
      %v187 = vunpack.c.l.b16 %v183
      %v188 = vunpack.c.l.b16 %v184
      %v189 = vpack.c.b16 %v188, %v187
      %v191 = vshrl.u32 %v189, 16
      %v193 = vrot.slane %v191, 7
      %v194 = vshll.u32 %v189, 16
      %v196 = vor.u32 %v193, %v194
      %vm198 = vcmask 1040384
      %vm199 = vsmask.f32 256
      %vm200 = vmand %vm198, %vm199
      %v201 = vsel %vm200, 0, %v196
      %v202 = vrot.slane %v194, 1
      %v203 = vor.u32 %v191, %v202
      %vm205 = vcmask 1047552
      %vm206 = vsmask.f32 7424
      %vm207 = vmand %vm205, %vm206
      %v208 = vsel %vm207, %v203, 0
      %v210 = vld [vmem:[%s1] sm:$0xf]
      %v211 = vld [vmem:[%s1 + $0x4] sm:$0xf]
      %v212 = vld [vmem:[%s1 + $0x8] sm:$0xf]
      %v213 = vld [vmem:[%s1 + $0xc] sm:$0xf]
      %v214 = vld [vmem:[%s1 + $0x10] sm:$0xf]
      %v215 = vld [vmem:[%s1 + $0x14] sm:$0xf]
      %v216 = vld [vmem:[%s1 + $0x18] sm:$0xf]
      %v217 = vld [vmem:[%s1 + $0x1c] sm:$0xf]
      %v218 = vld [vmem:[%s1 + $0x20] sm:$0xf]
      %v219 = vld [vmem:[%s1 + $0x24] sm:$0xf]
      %v220 = vld [vmem:[%s1 + $0x28] sm:$0xf]
      %v221 = vld [vmem:[%s1 + $0x2c] sm:$0xf]
      %v222 = vld [vmem:[%s1 + $0x30] sm:$0xf]
      %v223 = vld [vmem:[%s1 + $0x34] sm:$0xf]
      %v224 = vld [vmem:[%s1 + $0x38] sm:$0xf]
      %v225 = vld [vmem:[%s1 + $0x3c] sm:$0xf]
      %v226 = vld [vmem:[%s1 + $0x40] sm:$0xf]
      %v227 = vld [vmem:[%s1 + $0x44] sm:$0xf]
      %v228 = vld [vmem:[%s1 + $0x48] sm:$0xf]
      %v229 = vld [vmem:[%s1 + $0x4c] sm:$0xf]
      %v230 = vld [vmem:[%s1 + $0x50] sm:$0xf]
      %v231 = vld [vmem:[%s1 + $0x54] sm:$0xf]
      %v232 = vld [vmem:[%s1 + $0x58] sm:$0xf]
      %v233 = vld [vmem:[%s1 + $0x5c] sm:$0xf]
      %v234 = vld [vmem:[%s1 + $0x60] sm:$0xf]
      %v235 = vld [vmem:[%s1 + $0x64] sm:$0xf]
      %v236 = vld [vmem:[%s1 + $0x68] sm:$0xf]
      %v237 = vld [vmem:[%s1 + $0x6c] sm:$0xf]
      %v238 = vld [vmem:[%s1 + $0x70] sm:$0xf]
      %v239 = vld [vmem:[%s1 + $0x74] sm:$0xf]
      %v240 = vld [vmem:[%s1 + $0x78] sm:$0xf]
      %v241 = vld [vmem:[%s1 + $0x7c] sm:$0xf]
      %v242 = vld [vmem:[%s1 + $0x80] sm:$0xf]
      %v243 = vld [vmem:[%s1 + $0x84] sm:$0xf]
      %v244 = vld [vmem:[%s1 + $0x88] sm:$0xf]
      %v245 = vld [vmem:[%s1 + $0x8c] sm:$0xf]
      %v246 = vld [vmem:[%s1 + $0x90] sm:$0xf]
      %v247 = vld [vmem:[%s1 + $0x94] sm:$0xf]
      %v248 = vld [vmem:[%s1 + $0x98] sm:$0xf]
      %v249 = vld [vmem:[%s1 + $0x9c] sm:$0xf]
      %v250 = vld [vmem:[%s1 + $0xa0] sm:$0xf]
      %v251 = vld [vmem:[%s1 + $0xa4] sm:$0xf]
      %v252 = vld [vmem:[%s1 + $0xa8] sm:$0xf]
      %v253 = vld [vmem:[%s1 + $0xac] sm:$0xf]
      %v254 = vld [vmem:[%s1 + $0xb0] sm:$0xf]
      %v255 = vld [vmem:[%s1 + $0xb4] sm:$0xf]
      %v256 = vld [vmem:[%s1 + $0xb8] sm:$0xf]
      %v257 = vld [vmem:[%s1 + $0xbc] sm:$0xf]
      %v306 = vunpack.c.l.b16 %v210
      %v307 = vunpack.c.l.b16 %v211
      %v308 = vunpack.c.l.b16 %v212
      %v309 = vunpack.c.l.b16 %v213
      %v310 = vunpack.c.l.b16 %v214
      %v311 = vunpack.c.l.b16 %v215
      %v312 = vunpack.c.l.b16 %v216
      %v313 = vunpack.c.l.b16 %v217
      %v314 = vunpack.c.l.b16 %v218
      %v315 = vunpack.c.l.b16 %v219
      %v316 = vunpack.c.l.b16 %v220
      %v317 = vunpack.c.l.b16 %v221
      %v318 = vunpack.c.l.b16 %v222
      %v319 = vunpack.c.l.b16 %v223
      %v320 = vunpack.c.l.b16 %v224
      %v321 = vunpack.c.l.b16 %v225
      %v322 = vunpack.c.l.b16 %v226
      %v323 = vunpack.c.l.b16 %v227
      %v324 = vunpack.c.l.b16 %v228
      %v325 = vunpack.c.l.b16 %v229
      %v326 = vunpack.c.l.b16 %v230
      %v327 = vunpack.c.l.b16 %v231
      %v328 = vunpack.c.l.b16 %v232
      %v329 = vunpack.c.l.b16 %v233
      %v330 = vunpack.c.l.b16 %v234
      %v331 = vunpack.c.l.b16 %v235
      %v332 = vunpack.c.l.b16 %v236
      %v333 = vunpack.c.l.b16 %v237
      %v334 = vunpack.c.l.b16 %v238
      %v335 = vunpack.c.l.b16 %v239
      %v336 = vunpack.c.l.b16 %v240
      %v337 = vunpack.c.l.b16 %v241
      %v338 = vunpack.c.l.b16 %v242
      %v339 = vunpack.c.l.b16 %v243
      %v340 = vunpack.c.l.b16 %v244
      %v341 = vunpack.c.l.b16 %v245
      %v342 = vunpack.c.l.b16 %v246
      %v343 = vunpack.c.l.b16 %v247
      %v344 = vunpack.c.l.b16 %v248
      %v345 = vunpack.c.l.b16 %v249
      %v346 = vunpack.c.l.b16 %v250
      %v347 = vunpack.c.l.b16 %v251
      %v348 = vunpack.c.l.b16 %v252
      %v349 = vunpack.c.l.b16 %v253
      %v350 = vunpack.c.l.b16 %v254
      %v351 = vunpack.c.l.b16 %v255
      %v352 = vunpack.c.l.b16 %v256
      %v353 = vunpack.c.l.b16 %v257
      %v354 = vpack.c.b16 %v307, %v306
      %v355 = vpack.c.b16 %v309, %v308
      %v356 = vpack.c.b16 %v311, %v310
      %v357 = vpack.c.b16 %v313, %v312
      %v358 = vpack.c.b16 %v315, %v314
      %v359 = vpack.c.b16 %v317, %v316
      %v360 = vpack.c.b16 %v319, %v318
      %v361 = vpack.c.b16 %v321, %v320
      %v362 = vpack.c.b16 %v323, %v322
      %v363 = vpack.c.b16 %v325, %v324
      %v364 = vpack.c.b16 %v327, %v326
      %v365 = vpack.c.b16 %v329, %v328
      %v366 = vpack.c.b16 %v331, %v330
      %v367 = vpack.c.b16 %v333, %v332
      %v368 = vpack.c.b16 %v335, %v334
      %v369 = vpack.c.b16 %v337, %v336
      %v370 = vpack.c.b16 %v339, %v338
      %v371 = vpack.c.b16 %v341, %v340
      %v372 = vpack.c.b16 %v343, %v342
      %v373 = vpack.c.b16 %v345, %v344
      %v374 = vpack.c.b16 %v347, %v346
      %v375 = vpack.c.b16 %v349, %v348
      %v376 = vpack.c.b16 %v351, %v350
      %v377 = vpack.c.b16 %v353, %v352
      %402 = vmatprep.subr.bf16.mxu0 0
      %403 = vmatpush1.bf16.msra.mxu0 %v361
      %404 = vmatprep.subr.bf16.mxu0 0
      %405 = vmatpush1.bf16.msra.mxu0 %v360
      %406 = vmatprep.subr.bf16.mxu0 0
      %407 = vmatpush1.bf16.msra.mxu0 %v359
      %408 = vmatprep.subr.bf16.mxu0 0
      %409 = vmatpush1.bf16.msra.mxu0 %v358
      %410 = vmatprep.subr.bf16.mxu0 0
      %411 = vmatpush1.bf16.msra.mxu0 %v357
      %412 = vmatprep.subr.bf16.mxu0 0
      %413 = vmatpush1.bf16.msra.mxu0 %v356
      %414 = vmatprep.subr.bf16.mxu0 0
      %415 = vmatpush1.bf16.msra.mxu0 %v355
      %416 = vmatprep.subr.bf16.mxu0 0
      %417 = vmatpush1.bf16.msra.mxu0 %v354
      %418 = vmatprep.subr.bf16.mxu0 0
      %419 = vmatpush2.bf16.msra.mxu0 %v369
      %420 = vmatprep.subr.bf16.mxu0 0
      %421 = vmatpush2.bf16.msra.mxu0 %v368
      %422 = vmatprep.subr.bf16.mxu0 0
      %423 = vmatpush2.bf16.msra.mxu0 %v367
      %424 = vmatprep.subr.bf16.mxu0 0
      %425 = vmatpush2.bf16.msra.mxu0 %v366
      %426 = vmatprep.subr.bf16.mxu0 0
      %427 = vmatpush2.bf16.msra.mxu0 %v365
      %428 = vmatprep.subr.bf16.mxu0 0
      %429 = vmatpush2.bf16.msra.mxu0 %v364
      %430 = vmatprep.subr.bf16.mxu0 0
      %431 = vmatpush2.bf16.msra.mxu0 %v363
      %432 = vmatprep.subr.bf16.mxu0 0
      %433 = vmatpush2.bf16.msra.mxu0 %v362
      %434 = vmatprep.mubr.bf16.mxu0 %v189
      %435 = vmatmul.mubr.bf16.gmra.mxu0 %v201
      %v436 = vpop.f32.mrf.mxu0
      %v437 = vadd.f32 0.0, %v436
      %v438 = vpop.f32.mrf.mxu0
      %v439 = vpop.f32.mrf.mxu0
      %v440 = vadd.f32 0.0, %v439
      %v441 = vpop.f32.mrf.mxu0
      %442 = vdwg.mxu0
      %443 = vmatprep.subr.bf16.mxu0 0
      %444 = vmatpush1.bf16.msra.mxu0 %v377
      %445 = vmatprep.subr.bf16.mxu0 0
      %446 = vmatpush1.bf16.msra.mxu0 %v376
      %447 = vmatprep.subr.bf16.mxu0 0
      %448 = vmatpush1.bf16.msra.mxu0 %v375
      %449 = vmatprep.subr.bf16.mxu0 0
      %450 = vmatpush1.bf16.msra.mxu0 %v374
      %451 = vmatprep.subr.bf16.mxu0 0
      %452 = vmatpush1.bf16.msra.mxu0 %v373
      %453 = vmatprep.subr.bf16.mxu0 0
      %454 = vmatpush1.bf16.msra.mxu0 %v372
      %455 = vmatprep.subr.bf16.mxu0 0
      %456 = vmatpush1.bf16.msra.mxu0 %v371
      %457 = vmatprep.subr.bf16.mxu0 0
      %458 = vmatpush1.bf16.msra.mxu0 %v370
      %459 = vmatprep.subr.bf16.mxu0 0
      %460 = vmatpush2.bf16.msra.mxu0 0
      %461 = vmatprep.subr.bf16.mxu0 0
      %462 = vmatpush2.bf16.msra.mxu0 0
      %463 = vmatprep.subr.bf16.mxu0 0
      %464 = vmatpush2.bf16.msra.mxu0 0
      %465 = vmatprep.subr.bf16.mxu0 0
      %466 = vmatpush2.bf16.msra.mxu0 0
      %467 = vmatprep.subr.bf16.mxu0 0
      %468 = vmatpush2.bf16.msra.mxu0 0
      %469 = vmatprep.subr.bf16.mxu0 0
      %470 = vmatpush2.bf16.msra.mxu0 0
      %471 = vmatprep.subr.bf16.mxu0 0
      %472 = vmatpush2.bf16.msra.mxu0 0
      %473 = vmatprep.subr.bf16.mxu0 0
      %474 = vmatpush2.bf16.msra.mxu0 0
      %475 = vmatprep.mubr.bf16.mxu0 0
      %476 = vmatmul.mubr.bf16.gmra.mxu0 %v208
      %v477 = vpop.f32.mrf.mxu0
      %v478 = vadd.f32 %v437, %v477
      %v479 = vpop.f32.mrf.mxu0
      %v480 = vpop.f32.mrf.mxu0
      %v481 = vadd.f32 %v440, %v480
      %v482 = vpop.f32.mrf.mxu0
      %483 = vdwg.mxu0
      %484 = vst [vmem:[%s177] sm:$0xff] %v478
      %485 = vst [vmem:[%s177 + $0x8] sm:$0xff] %v481
      %v486 = vadd.f32 %v478, %v481
      %v487 = vrot.slane %v486, 4
      %v488 = vadd.f32 %v486, %v487
      %v489 = vrot.slane %v488, 2
      %v490 = vadd.f32 %v488, %v489
      %v491 = vrot.slane %v490, 1
      %v492 = vadd.f32 %v490, %v491
      %v493 = vmul.f32 %v478, %v478
      %v494 = vmul.f32 %v481, %v481
      %v495 = vadd.f32 %v493, %v494
      %v496 = vrot.slane %v495, 4
      %v497 = vadd.f32 %v495, %v496
      %v498 = vrot.slane %v497, 2
      %v499 = vadd.f32 %v497, %v498
      %v500 = vrot.slane %v499, 1
      %v501 = vadd.f32 %v499, %v500
      %vm502 = vcmask 1040384
      %v503 = vsel %vm502, %v492, %v501
      %504 = vst [vmem:[%s181] sm:$0x3] %v503
      %p505 = scmp.lt.s32.totalorder %s15, 1
      %s506 = scalar_select %p505, %s15, 1
      %s507 = smul.addr %s506, 2
      %s508 = smul.addr %s507, 8
      %s509 = scalar_lea.vmem %s2, %s508
      %p510 = scmp.lt.s32.totalorder %s15, 1
      %s511 = scalar_select %p510, %s15, 1
      %s512 = smul.addr %s511, 2
      %s513 = scalar_lea.vmem %s3, %s512
      // Predicated region
      $region29: #{residual_block.3} parent=27 // pred_check
        %p514 = pneg %p80
      $region30: #{residual_block.3} parent=27 // pred_check_branch
        %516 = sbr.rel (%p514) target = $region32
      $region31: #{residual_block.3} parent=27 // pred_region
        _
      $region32: #{residual_block.3} parent=27 // pred_fallthru
        _
      // Predicated region
      $region33: #{residual_block.3} parent=27 // pred_check
        %p517 = pneg %p106
      $region34: #{residual_block.3} parent=27 // pred_check_branch
        %519 = sbr.rel (%p517) target = $region36
      $region35: #{residual_block.3} parent=27 // pred_region
        _
      $region36: #{residual_block.3} parent=27 // pred_fallthru
        _
    $region28: #{residual_block.3} parent=5 // pred_fallthru
      _
    %p520 = scmp.le.s32.totalorder 2, %s10
    // Predicated region
    $region37: #{residual_block.3} parent=5 // pred_check
      %p521 = pneg %p520
    $region38: #{residual_block.3} parent=5 // pred_check_branch
      %523 = sbr.rel (%p521) target = $region40
    $region39: #{residual_block.3} parent=5 // pred_region
      %s524 = ssub.s32 %s10, 2
      // Predicated region
      $region41: #{residual_block.3} parent=39 // pred_check
        %p525 = pneg %p86
      $region42: #{residual_block.3} parent=39 // pred_check_branch
        %527 = sbr.rel (%p525) target = $region44
      $region43: #{residual_block.3} parent=39 // pred_region
        %p528 = scmp.lt.s32.totalorder %s16, 1
        %s529 = scalar_select %p528, %s16, 1
        %s530 = smul.addr %s529, 2
        %s531 = smul.addr %s530, 8
        %s532 = scalar_lea.vmem %s2, %s531
      $region44: #{residual_block.3} parent=39 // pred_fallthru
        _
      // Predicated region
      $region45: #{residual_block.3} parent=39 // pred_check
        %p533 = pneg %p112
      $region46: #{residual_block.3} parent=39 // pred_check_branch
        %535 = sbr.rel (%p533) target = $region48
      $region47: #{residual_block.3} parent=39 // pred_region
        %p536 = scmp.lt.s32.totalorder %s16, 1
        %s537 = scalar_select %p536, %s16, 1
        %s538 = smul.addr %s537, 2
        %s539 = scalar_lea.vmem %s3, %s538
      $region48: #{residual_block.3} parent=39 // pred_fallthru
        _
    $region40: #{residual_block.3} parent=5 // pred_fallthru
      _
  $region6: #{residual_block.3} parent=0 // loop_footer
    %s14 = sadd.s32 1, %s10
  $region7: #{residual_block.3} parent=0 // loop_footer_branch
    %9 = sbr.rel target = $region3
  $region8: #{residual_block.3} parent=0 // loop_exit
    _

// kernel: residual_block.5
$region0: #{residual_block.5}
  #allocation0 [shape = 'u32[]', space=smem, size = 0x4, offset = 0x4, fixed_abs, tag = 'smem constant byte address 0x4 - core index']
  #allocation1 [shape = 'u32[144,128]{1,0:T(1,128)}', space=vmem, size = 0x12000, scoped, tag = 'internal scratch']
  %s0 = inlined_call_operand.vmem [shape: f32[2,16,128], index: 0, kind: input, shape index: {}]
  %s1 = inlined_call_operand.vmem [shape: bf16[2,16,128], index: 1, kind: input, shape index: {}]
  %s2 = inlined_call_operand.vmem [shape: f32[1,128], index: 2, kind: input, shape index: {}]
  %s3 = inlined_call_operand.vmem [shape: f32[1,128], index: 3, kind: input, shape index: {}]
  %s4 = inlined_call_operand.vmem [shape: f32[2,16,128], index: 4, kind: output, shape index: {}]
  %s5 = sld [smem:[#allocation0]]
  $region49: #{residual_block.5} parent=0
    _
  %s7 = ssub.s32 1, %s5
  %s8 = scalar_select 0, %s7, %s5
  loop: start=0, step=1, limit=4
  $region2: #{residual_block.5} parent=0 // loop_pre_header
    _
  $region3: #{residual_block.5} parent=0 // loop_header
    %s10 = sphi 0, %s14
    %p11 = scmp.ge.s32.totalorder %s10, 4
    %s20 = sphi 0, %s22
    %s23 = sphi 0, %s20
    %s24 = sphi 0, %s23
    %s40 = sphi 0, %s24
    %s46 = sphi 0, %s48
    %s49 = sphi 0, %s46
    %s50 = sphi 0, %s49
    %s66 = sphi 0, %s50
    %s70 = sphi 0, %s70
    %s72 = sphi 0, %s70
    %s73 = sphi 0, %s72
    %s87 = sphi 0, %s73
    %s91 = sphi 0, %s91
    %s93 = sphi 0, %s91
    %s94 = sphi 0, %s93
    %s108 = sphi 0, %s94
    %s114 = sphi 0, %s116
    %s117 = sphi 0, %s114
    %s118 = sphi 0, %s117
    %s134 = sphi 0, %s118
  $region4: #{residual_block.5} parent=0 // loop_header_branch
    %13 = sbr.rel (%p11) target = $region8
  $region5: #{residual_block.5} parent=0 // loop_body
    %s15 = ssub.s32 %s10, 1
    %s16 = ssub.s32 %s10, 2
    %s17 = sadd.s32 %s10, 1
    %s18 = ssub.s32 %s10, %s17
    %p19 = scmp.eq.s32.totalorder %s18, 0
    %s21 = sadd.s32 %s20, 1
    %s22 = scalar_select %p19, %s20, %s21
    %p25 = pneg %p19
    %p26 = scmp.eq.s32.totalorder %s10, 1
    %p27 = por %p25, %p26
    %p28 = scmp.ne.s32.totalorder %s20, %s23
    %p29 = scmp.eq.s32.totalorder %s10, 0
    %p30 = por %p28, %p29
    %p31 = scmp.ne.s32.totalorder %s20, %s23
    %p32 = scmp.eq.s32.totalorder %s15, 1
    %p33 = por %p31, %p32
    %p34 = scmp.ne.s32.totalorder %s23, %s24
    %p35 = scmp.eq.s32.totalorder %s15, 0
    %p36 = por %p34, %p35
    %p37 = scmp.ne.s32.totalorder %s23, %s24
    %p38 = scmp.eq.s32.totalorder %s16, 1
    %p39 = por %p37, %p38
    %p41 = scmp.ne.s32.totalorder %s24, %s40
    %p42 = scmp.eq.s32.totalorder %s16, 0
    %p43 = por %p41, %p42
    %s44 = ssub.s32 %s10, %s17
    %p45 = scmp.eq.s32.totalorder %s44, 0
    %s47 = sadd.s32 %s46, 1
    %s48 = scalar_select %p45, %s46, %s47
    %p51 = pneg %p45
    %p52 = scmp.eq.s32.totalorder %s10, 1
    %p53 = por %p51, %p52
    %p54 = scmp.ne.s32.totalorder %s46, %s49
    %p55 = scmp.eq.s32.totalorder %s10, 0
    %p56 = por %p54, %p55
    %p57 = scmp.ne.s32.totalorder %s46, %s49
    %p58 = scmp.eq.s32.totalorder %s15, 1
    %p59 = por %p57, %p58
    %p60 = scmp.ne.s32.totalorder %s49, %s50
    %p61 = scmp.eq.s32.totalorder %s15, 0
    %p62 = por %p60, %p61
    %p63 = scmp.ne.s32.totalorder %s49, %s50
    %p64 = scmp.eq.s32.totalorder %s16, 1
    %p65 = por %p63, %p64
    %p67 = scmp.ne.s32.totalorder %s50, %s66
    %p68 = scmp.eq.s32.totalorder %s16, 0
    %p69 = por %p67, %p68
    %s71 = sadd.s32 %s70, 1
    %p74 = scmp.eq.s32.totalorder %s10, 1
    %p75 = scmp.ne.s32.totalorder %s70, %s72
    %p76 = scmp.eq.s32.totalorder %s10, 0
    %p77 = por %p75, %p76
    %p78 = scmp.ne.s32.totalorder %s70, %s72
    %p79 = scmp.eq.s32.totalorder %s15, 1
    %p80 = por %p78, %p79
    %p81 = scmp.ne.s32.totalorder %s72, %s73
    %p82 = scmp.eq.s32.totalorder %s15, 0
    %p83 = por %p81, %p82
    %p84 = scmp.ne.s32.totalorder %s72, %s73
    %p85 = scmp.eq.s32.totalorder %s16, 1
    %p86 = por %p84, %p85
    %p88 = scmp.ne.s32.totalorder %s73, %s87
    %p89 = scmp.eq.s32.totalorder %s16, 0
    %p90 = por %p88, %p89
    %s92 = sadd.s32 %s91, 1
    %p95 = scmp.eq.s32.totalorder %s10, 1
    %p96 = scmp.ne.s32.totalorder %s91, %s93
    %p97 = scmp.eq.s32.totalorder %s10, 0
    %p98 = por %p96, %p97
    %p99 = scmp.ne.s32.totalorder %s91, %s93
    %p100 = scmp.eq.s32.totalorder %s15, 1
    %p101 = por %p99, %p100
    %p102 = scmp.ne.s32.totalorder %s93, %s94
    %p103 = scmp.eq.s32.totalorder %s15, 0
    %p104 = por %p102, %p103
    %p105 = scmp.ne.s32.totalorder %s93, %s94
    %p106 = scmp.eq.s32.totalorder %s16, 1
    %p107 = por %p105, %p106
    %p109 = scmp.ne.s32.totalorder %s94, %s108
    %p110 = scmp.eq.s32.totalorder %s16, 0
    %p111 = por %p109, %p110
    %s112 = ssub.s32 %s10, %s17
    %p113 = scmp.eq.s32.totalorder %s112, 0
    %s115 = sadd.s32 %s114, 1
    %s116 = scalar_select %p113, %s114, %s115
    %p119 = pneg %p113
    %p120 = scmp.eq.s32.totalorder %s10, 1
    %p121 = por %p119, %p120
    %p122 = scmp.ne.s32.totalorder %s114, %s117
    %p123 = scmp.eq.s32.totalorder %s10, 0
    %p124 = por %p122, %p123
    %p125 = scmp.ne.s32.totalorder %s114, %s117
    %p126 = scmp.eq.s32.totalorder %s15, 1
    %p127 = por %p125, %p126
    %p128 = scmp.ne.s32.totalorder %s117, %s118
    %p129 = scmp.eq.s32.totalorder %s15, 0
    %p130 = por %p128, %p129
    %p131 = scmp.ne.s32.totalorder %s117, %s118
    %p132 = scmp.eq.s32.totalorder %s16, 1
    %p133 = por %p131, %p132
    %p135 = scmp.ne.s32.totalorder %s118, %s134
    %p136 = scmp.eq.s32.totalorder %s16, 0
    %p137 = por %p135, %p136
    %p138 = scmp.le.s32.totalorder 1, %s10
    %p139 = scmp.lt.s32.totalorder %s10, 3
    %p140 = pnand %p138, %p139
    %p141 = pneg %p140
    // Predicated region
    $region9: #{residual_block.5} parent=5 // pred_check
      _
    $region10: #{residual_block.5} parent=5 // pred_check_branch
      %143 = sbr.rel (%p140) target = $region12
    $region11: #{residual_block.5} parent=5 // pred_region
      %s144 = ssub.s32 %s10, 1
      // Predicated region
      $region13: #{residual_block.5} parent=11 // pred_check
        %p145 = pneg %p83
      $region14: #{residual_block.5} parent=11 // pred_check_branch
        %147 = sbr.rel (%p145) target = $region16
      $region15: #{residual_block.5} parent=11 // pred_region
        _
      $region16: #{residual_block.5} parent=11 // pred_fallthru
        _
      // Predicated region
      $region17: #{residual_block.5} parent=11 // pred_check
        %p148 = pneg %p104
      $region18: #{residual_block.5} parent=11 // pred_check_branch
        %150 = sbr.rel (%p148) target = $region20
      $region19: #{residual_block.5} parent=11 // pred_region
        _
      $region20: #{residual_block.5} parent=11 // pred_fallthru
        _
    $region12: #{residual_block.5} parent=5 // pred_fallthru
      _
    %p151 = scmp.lt.s32.totalorder %s10, 2
    // Predicated region
    $region21: #{residual_block.5} parent=5 // pred_check
      %p152 = pneg %p151
    $region22: #{residual_block.5} parent=5 // pred_check_branch
      %154 = sbr.rel (%p152) target = $region24
    $region23: #{residual_block.5} parent=5 // pred_region
      // Predicated region
      $region25: #{residual_block.5} parent=23 // pred_check
        %p155 = pneg %p30
      $region26: #{residual_block.5} parent=23 // pred_check_branch
        %157 = sbr.rel (%p155) target = $region28
      $region27: #{residual_block.5} parent=23 // pred_region
        %p158 = scmp.lt.s32.totalorder %s10, 1
        %s159 = scalar_select %p158, %s10, 1
        %s160 = smul.addr %s159, 2
        %s161 = smul.addr %s160, 8
        %s162 = scalar_lea.vmem %s0, %s161
      $region28: #{residual_block.5} parent=23 // pred_fallthru
        _
      // Predicated region
      $region29: #{residual_block.5} parent=23 // pred_check
        %p163 = pneg %p56
      $region30: #{residual_block.5} parent=23 // pred_check_branch
        %165 = sbr.rel (%p163) target = $region32
      $region31: #{residual_block.5} parent=23 // pred_region
        %p166 = scmp.lt.s32.totalorder %s10, 1
        %s167 = scalar_select %p166, %s10, 1
        %s168 = smul.addr %s167, 2
        %s169 = smul.addr %s168, 4
        %s170 = scalar_lea.vmem %s1, %s169
      $region32: #{residual_block.5} parent=23 // pred_fallthru
        _
    $region24: #{residual_block.5} parent=5 // pred_fallthru
      _
    %p171 = scmp.le.s32.totalorder 1, %s10
    %p172 = scmp.lt.s32.totalorder %s10, 3
    %p173 = pnand %p171, %p172
    %p174 = pneg %p173
    // Predicated region
    $region33: #{residual_block.5} parent=5 // pred_check
      _
    $region34: #{residual_block.5} parent=5 // pred_check_branch
      %176 = sbr.rel (%p173) target = $region36
    $region35: #{residual_block.5} parent=5 // pred_region
      %s177 = ssub.s32 %s10, 1
      %p178 = scmp.lt.s32.totalorder %s15, 1
      %s179 = scalar_select %p178, %s15, 1
      %s180 = smul.addr %s179, 2
      %s181 = smul.addr %s180, 8
      %s182 = scalar_lea.vmem %s0, %s181
      %p183 = pneg %p36
      %p184 = pneg %p33
      %p185 = scmp.lt.s32.totalorder %s15, 1
      %s186 = scalar_select %p185, %s15, 1
      %s187 = smul.addr %s186, 2
      %s188 = smul.addr %s187, 4
      %s189 = scalar_lea.vmem %s1, %s188
      %p190 = pneg %p62
      %p191 = pneg %p59
      %p192 = pneg %p83
      %p193 = pneg %p80
      %p194 = pneg %p104
      %p195 = pneg %p101
      %p196 = pneg %p130
      %p197 = pneg %p127
      %p198 = scmp.lt.s32.totalorder %s15, 1
      %s199 = scalar_select %p198, %s15, 1
      %s200 = smul.addr %s199, 2
      %s201 = smul.addr %s200, 8
      %s202 = scalar_lea.vmem %s4, %s201
      %p203 = scmp.lt.s32.totalorder %s15, 1
      %s204 = scalar_select %p203, %s15, 1
      %s205 = smul.addr %s204, 2
      %s206 = smul.addr %s205, 8
      %s207 = scalar_lea.vmem %s0, %s206
      %p208 = scmp.lt.s32.totalorder %s15, 1
      %s209 = scalar_select %p208, %s15, 1
      %s210 = smul.addr %s209, 2
      %s211 = smul.addr %s210, 4
      %s212 = scalar_lea.vmem %s1, %s211
      %p213 = scmp.lt.s32.totalorder %s15, 1
      %s214 = scalar_select %p213, %s15, 1
      %s215 = smul.addr %s214, 2
      %s216 = smul.addr %s215, 8
      %s217 = scalar_lea.vmem %s4, %s216
      %v218 = vld [vmem:[%s212] sm:$0xf]
      %v219 = vld [vmem:[%s212 + $0x4] sm:$0xf]
      %v220 = vunpack.c.l.bf16 %v218
      %v221 = vunpack.c.l.bf16 %v219
      %v222 = vld [vmem:[%s207] sm:$0xff]
      %v223 = vld [vmem:[%s207 + $0x8] sm:$0xff]
      %v224 = vld [vmem:[%s2] sm:$0x1]
      %v226 = vlaneseq
      %v227 = vshrl.u32 %v226, 7
      %v228 = vsub.s32 0, %v227
      %v229 = vrot.slane %v224, %v228
      %v231 = vmul.f32 %v222, %v229
      %v232 = vmul.f32 %v223, %v229
      %v233 = vld [vmem:[%s3] sm:$0x1]
      %v235 = vlaneseq
      %v236 = vshrl.u32 %v235, 7
      %v237 = vsub.s32 0, %v236
      %v238 = vrot.slane %v233, %v237
      %v240 = vadd.f32 %v231, %v238
      %v241 = vadd.f32 %v232, %v238
      %v242 = vadd.f32 %v240, %v220
      %v243 = vadd.f32 %v241, %v221
      %v244 = vmax.f32 %v242, 0.0
      %v245 = vmax.f32 %v243, 0.0
      %246 = vst [vmem:[%s217] sm:$0xff] %v244
      %247 = vst [vmem:[%s217 + $0x8] sm:$0xff] %v245
      %p248 = scmp.lt.s32.totalorder %s15, 1
      %s249 = scalar_select %p248, %s15, 1
      %s250 = smul.addr %s249, 2
      %s251 = smul.addr %s250, 8
      %s252 = scalar_lea.vmem %s4, %s251
      // Predicated region
      $region37: #{residual_block.5} parent=35 // pred_check
        %p253 = pneg %p127
      $region38: #{residual_block.5} parent=35 // pred_check_branch
        %255 = sbr.rel (%p253) target = $region40
      $region39: #{residual_block.5} parent=35 // pred_region
        _
      $region40: #{residual_block.5} parent=35 // pred_fallthru
        _
    $region36: #{residual_block.5} parent=5 // pred_fallthru
      _
    %p256 = scmp.le.s32.totalorder 2, %s10
    // Predicated region
    $region41: #{residual_block.5} parent=5 // pred_check
      %p257 = pneg %p256
    $region42: #{residual_block.5} parent=5 // pred_check_branch
      %259 = sbr.rel (%p257) target = $region44
    $region43: #{residual_block.5} parent=5 // pred_region
      %s260 = ssub.s32 %s10, 2
      // Predicated region
      $region45: #{residual_block.5} parent=43 // pred_check
        %p261 = pneg %p133
      $region46: #{residual_block.5} parent=43 // pred_check_branch
        %263 = sbr.rel (%p261) target = $region48
      $region47: #{residual_block.5} parent=43 // pred_region
        %p264 = scmp.lt.s32.totalorder %s16, 1
        %s265 = scalar_select %p264, %s16, 1
        %s266 = smul.addr %s265, 2
        %s267 = smul.addr %s266, 8
        %s268 = scalar_lea.vmem %s4, %s267
      $region48: #{residual_block.5} parent=43 // pred_fallthru
        _
    $region44: #{residual_block.5} parent=5 // pred_fallthru
      _
  $region6: #{residual_block.5} parent=0 // loop_footer
    %s14 = sadd.s32 1, %s10
  $region7: #{residual_block.5} parent=0 // loop_footer_branch
    %9 = sbr.rel target = $region3
  $region8: #{residual_block.5} parent=0 // loop_exit
    _

// kernel: residual_block.4
$region0: #{residual_block.4}
  #allocation0 [shape = 'u32[]', space=smem, size = 0x4, offset = 0x4, fixed_abs, tag = 'smem constant byte address 0x4 - core index']
  #allocation1 [shape = 'u32[144,128]{1,0:T(1,128)}', space=vmem, size = 0x12000, scoped, tag = 'internal scratch']
  %s0 = inlined_call_operand.vmem [shape: f32[2,16,128], index: 0, kind: input, shape index: {}]
  %s1 = inlined_call_operand.vmem [shape: f32[1,128], index: 1, kind: input, shape index: {}]
  %s2 = inlined_call_operand.vmem [shape: f32[1,128], index: 2, kind: input, shape index: {}]
  %s3 = inlined_call_operand.vmem [shape: bf16[384,128], index: 3, kind: input, shape index: {}]
  %s4 = inlined_call_operand.vmem [shape: f32[2,16,128], index: 4, kind: output, shape index: {0}]
  %s5 = inlined_call_operand.vmem [shape: f32[2,2,128], index: 5, kind: output, shape index: {1}]
  %6 = xla_tuple %s4, %s5
  %s7 = sld [smem:[#allocation0]]
  $region57: #{residual_block.4} parent=0
    _
  %s9 = ssub.s32 1, %s7
  %s10 = scalar_select 0, %s9, %s7
  loop: start=0, step=1, limit=4
  $region2: #{residual_block.4} parent=0 // loop_pre_header
    _
  $region3: #{residual_block.4} parent=0 // loop_header
    %s12 = sphi 0, %s16
    %p13 = scmp.ge.s32.totalorder %s12, 4
    %s22 = sphi 0, %s24
    %s25 = sphi 0, %s22
    %s26 = sphi 0, %s25
    %s42 = sphi 0, %s26
    %s46 = sphi 0, %s46
    %s48 = sphi 0, %s46
    %s49 = sphi 0, %s48
    %s63 = sphi 0, %s49
    %s67 = sphi 0, %s67
    %s69 = sphi 0, %s67
    %s70 = sphi 0, %s69
    %s84 = sphi 0, %s70
    %s88 = sphi 0, %s88
    %s90 = sphi 0, %s88
    %s91 = sphi 0, %s90
    %s105 = sphi 0, %s91
    %s111 = sphi 0, %s113
    %s114 = sphi 0, %s111
    %s115 = sphi 0, %s114
    %s131 = sphi 0, %s115
    %s137 = sphi 0, %s139
    %s140 = sphi 0, %s137
    %s141 = sphi 0, %s140
    %s157 = sphi 0, %s141
  $region4: #{residual_block.4} parent=0 // loop_header_branch
    %15 = sbr.rel (%p13) target = $region8
  $region5: #{residual_block.4} parent=0 // loop_body
    %s17 = ssub.s32 %s12, 1
    %s18 = ssub.s32 %s12, 2
    %s19 = sadd.s32 %s12, 1
    %s20 = ssub.s32 %s12, %s19
    %p21 = scmp.eq.s32.totalorder %s20, 0
    %s23 = sadd.s32 %s22, 1
    %s24 = scalar_select %p21, %s22, %s23
    %p27 = pneg %p21
    %p28 = scmp.eq.s32.totalorder %s12, 1
    %p29 = por %p27, %p28
    %p30 = scmp.ne.s32.totalorder %s22, %s25
    %p31 = scmp.eq.s32.totalorder %s12, 0
    %p32 = por %p30, %p31
    %p33 = scmp.ne.s32.totalorder %s22, %s25
    %p34 = scmp.eq.s32.totalorder %s17, 1
    %p35 = por %p33, %p34
    %p36 = scmp.ne.s32.totalorder %s25, %s26
    %p37 = scmp.eq.s32.totalorder %s17, 0
    %p38 = por %p36, %p37
    %p39 = scmp.ne.s32.totalorder %s25, %s26
    %p40 = scmp.eq.s32.totalorder %s18, 1
    %p41 = por %p39, %p40
    %p43 = scmp.ne.s32.totalorder %s26, %s42
    %p44 = scmp.eq.s32.totalorder %s18, 0
    %p45 = por %p43, %p44
    %s47 = sadd.s32 %s46, 1
    %p50 = scmp.eq.s32.totalorder %s12, 1
    %p51 = scmp.ne.s32.totalorder %s46, %s48
    %p52 = scmp.eq.s32.totalorder %s12, 0
    %p53 = por %p51, %p52
    %p54 = scmp.ne.s32.totalorder %s46, %s48
    %p55 = scmp.eq.s32.totalorder %s17, 1
    %p56 = por %p54, %p55
    %p57 = scmp.ne.s32.totalorder %s48, %s49
    %p58 = scmp.eq.s32.totalorder %s17, 0
    %p59 = por %p57, %p58
    %p60 = scmp.ne.s32.totalorder %s48, %s49
    %p61 = scmp.eq.s32.totalorder %s18, 1
    %p62 = por %p60, %p61
    %p64 = scmp.ne.s32.totalorder %s49, %s63
    %p65 = scmp.eq.s32.totalorder %s18, 0
    %p66 = por %p64, %p65
    %s68 = sadd.s32 %s67, 1
    %p71 = scmp.eq.s32.totalorder %s12, 1
    %p72 = scmp.ne.s32.totalorder %s67, %s69
    %p73 = scmp.eq.s32.totalorder %s12, 0
    %p74 = por %p72, %p73
    %p75 = scmp.ne.s32.totalorder %s67, %s69
    %p76 = scmp.eq.s32.totalorder %s17, 1
    %p77 = por %p75, %p76
    %p78 = scmp.ne.s32.totalorder %s69, %s70
    %p79 = scmp.eq.s32.totalorder %s17, 0
    %p80 = por %p78, %p79
    %p81 = scmp.ne.s32.totalorder %s69, %s70
    %p82 = scmp.eq.s32.totalorder %s18, 1
    %p83 = por %p81, %p82
    %p85 = scmp.ne.s32.totalorder %s70, %s84
    %p86 = scmp.eq.s32.totalorder %s18, 0
    %p87 = por %p85, %p86
    %s89 = sadd.s32 %s88, 1
    %p92 = scmp.eq.s32.totalorder %s12, 1
    %p93 = scmp.ne.s32.totalorder %s88, %s90
    %p94 = scmp.eq.s32.totalorder %s12, 0
    %p95 = por %p93, %p94
    %p96 = scmp.ne.s32.totalorder %s88, %s90
    %p97 = scmp.eq.s32.totalorder %s17, 1
    %p98 = por %p96, %p97
    %p99 = scmp.ne.s32.totalorder %s90, %s91
    %p100 = scmp.eq.s32.totalorder %s17, 0
    %p101 = por %p99, %p100
    %p102 = scmp.ne.s32.totalorder %s90, %s91
    %p103 = scmp.eq.s32.totalorder %s18, 1
    %p104 = por %p102, %p103
    %p106 = scmp.ne.s32.totalorder %s91, %s105
    %p107 = scmp.eq.s32.totalorder %s18, 0
    %p108 = por %p106, %p107
    %s109 = ssub.s32 %s12, %s19
    %p110 = scmp.eq.s32.totalorder %s109, 0
    %s112 = sadd.s32 %s111, 1
    %s113 = scalar_select %p110, %s111, %s112
    %p116 = pneg %p110
    %p117 = scmp.eq.s32.totalorder %s12, 1
    %p118 = por %p116, %p117
    %p119 = scmp.ne.s32.totalorder %s111, %s114
    %p120 = scmp.eq.s32.totalorder %s12, 0
    %p121 = por %p119, %p120
    %p122 = scmp.ne.s32.totalorder %s111, %s114
    %p123 = scmp.eq.s32.totalorder %s17, 1
    %p124 = por %p122, %p123
    %p125 = scmp.ne.s32.totalorder %s114, %s115
    %p126 = scmp.eq.s32.totalorder %s17, 0
    %p127 = por %p125, %p126
    %p128 = scmp.ne.s32.totalorder %s114, %s115
    %p129 = scmp.eq.s32.totalorder %s18, 1
    %p130 = por %p128, %p129
    %p132 = scmp.ne.s32.totalorder %s115, %s131
    %p133 = scmp.eq.s32.totalorder %s18, 0
    %p134 = por %p132, %p133
    %s135 = ssub.s32 %s12, %s19
    %p136 = scmp.eq.s32.totalorder %s135, 0
    %s138 = sadd.s32 %s137, 1
    %s139 = scalar_select %p136, %s137, %s138
    %p142 = pneg %p136
    %p143 = scmp.eq.s32.totalorder %s12, 1
    %p144 = por %p142, %p143
    %p145 = scmp.ne.s32.totalorder %s137, %s140
    %p146 = scmp.eq.s32.totalorder %s12, 0
    %p147 = por %p145, %p146
    %p148 = scmp.ne.s32.totalorder %s137, %s140
    %p149 = scmp.eq.s32.totalorder %s17, 1
    %p150 = por %p148, %p149
    %p151 = scmp.ne.s32.totalorder %s140, %s141
    %p152 = scmp.eq.s32.totalorder %s17, 0
    %p153 = por %p151, %p152
    %p154 = scmp.ne.s32.totalorder %s140, %s141
    %p155 = scmp.eq.s32.totalorder %s18, 1
    %p156 = por %p154, %p155
    %p158 = scmp.ne.s32.totalorder %s141, %s157
    %p159 = scmp.eq.s32.totalorder %s18, 0
    %p160 = por %p158, %p159
    %p161 = scmp.le.s32.totalorder 1, %s12
    %p162 = scmp.lt.s32.totalorder %s12, 3
    %p163 = pnand %p161, %p162
    %p164 = pneg %p163
    // Predicated region
    $region9: #{residual_block.4} parent=5 // pred_check
      _
    $region10: #{residual_block.4} parent=5 // pred_check_branch
      %166 = sbr.rel (%p163) target = $region12
    $region11: #{residual_block.4} parent=5 // pred_region
      %s167 = ssub.s32 %s12, 1
      // Predicated region
      $region13: #{residual_block.4} parent=11 // pred_check
        %p168 = pneg %p59
      $region14: #{residual_block.4} parent=11 // pred_check_branch
        %170 = sbr.rel (%p168) target = $region16
      $region15: #{residual_block.4} parent=11 // pred_region
        _
      $region16: #{residual_block.4} parent=11 // pred_fallthru
        _
      // Predicated region
      $region17: #{residual_block.4} parent=11 // pred_check
        %p171 = pneg %p80
      $region18: #{residual_block.4} parent=11 // pred_check_branch
        %173 = sbr.rel (%p171) target = $region20
      $region19: #{residual_block.4} parent=11 // pred_region
        _
      $region20: #{residual_block.4} parent=11 // pred_fallthru
        _
      // Predicated region
      $region21: #{residual_block.4} parent=11 // pred_check
        %p174 = pneg %p101
      $region22: #{residual_block.4} parent=11 // pred_check_branch
        %176 = sbr.rel (%p174) target = $region24
      $region23: #{residual_block.4} parent=11 // pred_region
        _
      $region24: #{residual_block.4} parent=11 // pred_fallthru
        _
    $region12: #{residual_block.4} parent=5 // pred_fallthru
      _
    %p177 = scmp.lt.s32.totalorder %s12, 2
    // Predicated region
    $region25: #{residual_block.4} parent=5 // pred_check
      %p178 = pneg %p177
    $region26: #{residual_block.4} parent=5 // pred_check_branch
      %180 = sbr.rel (%p178) target = $region28
    $region27: #{residual_block.4} parent=5 // pred_region
      // Predicated region
      $region29: #{residual_block.4} parent=27 // pred_check
        %p181 = pneg %p32
      $region30: #{residual_block.4} parent=27 // pred_check_branch
        %183 = sbr.rel (%p181) target = $region32
      $region31: #{residual_block.4} parent=27 // pred_region
        %p184 = scmp.lt.s32.totalorder %s12, 1
        %s185 = scalar_select %p184, %s12, 1
        %s186 = smul.addr %s185, 2
        %s187 = smul.addr %s186, 8
        %s188 = scalar_lea.vmem %s0, %s187
      $region32: #{residual_block.4} parent=27 // pred_fallthru
        _
    $region28: #{residual_block.4} parent=5 // pred_fallthru
      _
    %p189 = scmp.le.s32.totalorder 1, %s12
    %p190 = scmp.lt.s32.totalorder %s12, 3
    %p191 = pnand %p189, %p190
    %p192 = pneg %p191
    // Predicated region
    $region33: #{residual_block.4} parent=5 // pred_check
      _
    $region34: #{residual_block.4} parent=5 // pred_check_branch
      %194 = sbr.rel (%p191) target = $region36
    $region35: #{residual_block.4} parent=5 // pred_region
      %s195 = ssub.s32 %s12, 1
      %p196 = scmp.lt.s32.totalorder %s17, 1
      %s197 = scalar_select %p196, %s17, 1
      %s198 = smul.addr %s197, 2
      %s199 = smul.addr %s198, 8
      %s200 = scalar_lea.vmem %s0, %s199
      %p201 = pneg %p38
      %p202 = pneg %p35
      %p203 = pneg %p59
      %p204 = pneg %p56
      %p205 = pneg %p80
      %p206 = pneg %p77
      %p207 = pneg %p101
      %p208 = pneg %p98
      %p209 = pneg %p127
      %p210 = pneg %p124
      %p211 = scmp.lt.s32.totalorder %s17, 1
      %s212 = scalar_select %p211, %s17, 1
      %s213 = smul.addr %s212, 2
      %s214 = smul.addr %s213, 8
      %s215 = scalar_lea.vmem %s4, %s214
      %p216 = pneg %p153
      %p217 = pneg %p150
      %p218 = scmp.lt.s32.totalorder %s17, 1
      %s219 = scalar_select %p218, %s17, 1
      %s220 = smul.addr %s219, 2
      %s221 = scalar_lea.vmem %s5, %s220
      %p222 = scmp.lt.s32.totalorder %s17, 1
      %s223 = scalar_select %p222, %s17, 1
      %s224 = smul.addr %s223, 2
      %s225 = smul.addr %s224, 8
      %s226 = scalar_lea.vmem %s0, %s225
      %p227 = scmp.lt.s32.totalorder %s17, 1
      %s228 = scalar_select %p227, %s17, 1
      %s229 = smul.addr %s228, 2
      %s230 = smul.addr %s229, 8
      %s231 = scalar_lea.vmem %s4, %s230
      %p232 = scmp.lt.s32.totalorder %s17, 1
      %s233 = scalar_select %p232, %s17, 1
      %s234 = smul.addr %s233, 2
      %s235 = scalar_lea.vmem %s5, %s234
      %v237 = vld [vmem:[%s226] sm:$0xff]
      %v238 = vld [vmem:[%s226 + $0x8] sm:$0xff]
      %v239 = vld [vmem:[%s1] sm:$0x1]
      %v241 = vlaneseq
      %v242 = vshrl.u32 %v241, 7
      %v243 = vsub.s32 0, %v242
      %v244 = vrot.slane %v239, %v243
      %v246 = vmul.f32 %v237, %v244
      %v247 = vmul.f32 %v238, %v244
      %v248 = vld [vmem:[%s2] sm:$0x1]
      %v250 = vlaneseq
      %v251 = vshrl.u32 %v250, 7
      %v252 = vsub.s32 0, %v251
      %v253 = vrot.slane %v248, %v252
      %v255 = vadd.f32 %v246, %v253
      %v256 = vadd.f32 %v247, %v253
      %v257 = vmax.f32 %v255, 0.0
      %v258 = vmax.f32 %v256, 0.0
      %v259 = vpack.c.bf16 %v258, %v257
      %v261 = vshrl.u32 %v259, 16
      %v263 = vrot.slane %v261, 7
      %v264 = vshll.u32 %v259, 16
      %v266 = vor.u32 %v263, %v264
      %vm268 = vcmask 1040384
      %vm269 = vsmask.f32 256
      %vm270 = vmand %vm268, %vm269
      %v271 = vsel %vm270, 0, %v266
      %v272 = vrot.slane %v264, 1
      %v273 = vor.u32 %v261, %v272
      %vm275 = vcmask 1047552
      %vm276 = vsmask.f32 7424
      %vm277 = vmand %vm275, %vm276
      %v278 = vsel %vm277, %v273, 0
      %v279 = vld [vmem:[%s3] sm:$0xf]
      %v280 = vld [vmem:[%s3 + $0x4] sm:$0xf]
      %v281 = vld [vmem:[%s3 + $0x8] sm:$0xf]
      %v282 = vld [vmem:[%s3 + $0xc] sm:$0xf]
      %v283 = vld [vmem:[%s3 + $0x10] sm:$0xf]
      %v284 = vld [vmem:[%s3 + $0x14] sm:$0xf]
      %v285 = vld [vmem:[%s3 + $0x18] sm:$0xf]
      %v286 = vld [vmem:[%s3 + $0x1c] sm:$0xf]
      %v287 = vld [vmem:[%s3 + $0x20] sm:$0xf]
      %v288 = vld [vmem:[%s3 + $0x24] sm:$0xf]
      %v289 = vld [vmem:[%s3 + $0x28] sm:$0xf]
      %v290 = vld [vmem:[%s3 + $0x2c] sm:$0xf]
      %v291 = vld [vmem:[%s3 + $0x30] sm:$0xf]
      %v292 = vld [vmem:[%s3 + $0x34] sm:$0xf]
      %v293 = vld [vmem:[%s3 + $0x38] sm:$0xf]
      %v294 = vld [vmem:[%s3 + $0x3c] sm:$0xf]
      %v295 = vld [vmem:[%s3 + $0x40] sm:$0xf]
      %v296 = vld [vmem:[%s3 + $0x44] sm:$0xf]
      %v297 = vld [vmem:[%s3 + $0x48] sm:$0xf]
      %v298 = vld [vmem:[%s3 + $0x4c] sm:$0xf]
      %v299 = vld [vmem:[%s3 + $0x50] sm:$0xf]
      %v300 = vld [vmem:[%s3 + $0x54] sm:$0xf]
      %v301 = vld [vmem:[%s3 + $0x58] sm:$0xf]
      %v302 = vld [vmem:[%s3 + $0x5c] sm:$0xf]
      %v303 = vld [vmem:[%s3 + $0x60] sm:$0xf]
      %v304 = vld [vmem:[%s3 + $0x64] sm:$0xf]
      %v305 = vld [vmem:[%s3 + $0x68] sm:$0xf]
      %v306 = vld [vmem:[%s3 + $0x6c] sm:$0xf]
      %v307 = vld [vmem:[%s3 + $0x70] sm:$0xf]
      %v308 = vld [vmem:[%s3 + $0x74] sm:$0xf]
      %v309 = vld [vmem:[%s3 + $0x78] sm:$0xf]
      %v310 = vld [vmem:[%s3 + $0x7c] sm:$0xf]
      %v311 = vld [vmem:[%s3 + $0x80] sm:$0xf]
      %v312 = vld [vmem:[%s3 + $0x84] sm:$0xf]
      %v313 = vld [vmem:[%s3 + $0x88] sm:$0xf]
      %v314 = vld [vmem:[%s3 + $0x8c] sm:$0xf]
      %v315 = vld [vmem:[%s3 + $0x90] sm:$0xf]
      %v316 = vld [vmem:[%s3 + $0x94] sm:$0xf]
      %v317 = vld [vmem:[%s3 + $0x98] sm:$0xf]
      %v318 = vld [vmem:[%s3 + $0x9c] sm:$0xf]
      %v319 = vld [vmem:[%s3 + $0xa0] sm:$0xf]
      %v320 = vld [vmem:[%s3 + $0xa4] sm:$0xf]
      %v321 = vld [vmem:[%s3 + $0xa8] sm:$0xf]
      %v322 = vld [vmem:[%s3 + $0xac] sm:$0xf]
      %v323 = vld [vmem:[%s3 + $0xb0] sm:$0xf]
      %v324 = vld [vmem:[%s3 + $0xb4] sm:$0xf]
      %v325 = vld [vmem:[%s3 + $0xb8] sm:$0xf]
      %v326 = vld [vmem:[%s3 + $0xbc] sm:$0xf]
      %v375 = vunpack.c.l.b16 %v279
      %v376 = vunpack.c.l.b16 %v280
      %v377 = vunpack.c.l.b16 %v281
      %v378 = vunpack.c.l.b16 %v282
      %v379 = vunpack.c.l.b16 %v283
      %v380 = vunpack.c.l.b16 %v284
      %v381 = vunpack.c.l.b16 %v285
      %v382 = vunpack.c.l.b16 %v286
      %v383 = vunpack.c.l.b16 %v287
      %v384 = vunpack.c.l.b16 %v288
      %v385 = vunpack.c.l.b16 %v289
      %v386 = vunpack.c.l.b16 %v290
      %v387 = vunpack.c.l.b16 %v291
      %v388 = vunpack.c.l.b16 %v292
      %v389 = vunpack.c.l.b16 %v293
      %v390 = vunpack.c.l.b16 %v294
      %v391 = vunpack.c.l.b16 %v295
      %v392 = vunpack.c.l.b16 %v296
      %v393 = vunpack.c.l.b16 %v297
      %v394 = vunpack.c.l.b16 %v298
      %v395 = vunpack.c.l.b16 %v299
      %v396 = vunpack.c.l.b16 %v300
      %v397 = vunpack.c.l.b16 %v301
      %v398 = vunpack.c.l.b16 %v302
      %v399 = vunpack.c.l.b16 %v303
      %v400 = vunpack.c.l.b16 %v304
      %v401 = vunpack.c.l.b16 %v305
      %v402 = vunpack.c.l.b16 %v306
      %v403 = vunpack.c.l.b16 %v307
      %v404 = vunpack.c.l.b16 %v308
      %v405 = vunpack.c.l.b16 %v309
      %v406 = vunpack.c.l.b16 %v310
      %v407 = vunpack.c.l.b16 %v311
      %v408 = vunpack.c.l.b16 %v312
      %v409 = vunpack.c.l.b16 %v313
      %v410 = vunpack.c.l.b16 %v314
      %v411 = vunpack.c.l.b16 %v315
      %v412 = vunpack.c.l.b16 %v316
      %v413 = vunpack.c.l.b16 %v317
      %v414 = vunpack.c.l.b16 %v318
      %v415 = vunpack.c.l.b16 %v319
      %v416 = vunpack.c.l.b16 %v320
      %v417 = vunpack.c.l.b16 %v321
      %v418 = vunpack.c.l.b16 %v322
      %v419 = vunpack.c.l.b16 %v323
      %v420 = vunpack.c.l.b16 %v324
      %v421 = vunpack.c.l.b16 %v325
      %v422 = vunpack.c.l.b16 %v326
      %v423 = vpack.c.b16 %v376, %v375
      %v424 = vpack.c.b16 %v378, %v377
      %v425 = vpack.c.b16 %v380, %v379
      %v426 = vpack.c.b16 %v382, %v381
      %v427 = vpack.c.b16 %v384, %v383
      %v428 = vpack.c.b16 %v386, %v385
      %v429 = vpack.c.b16 %v388, %v387
      %v430 = vpack.c.b16 %v390, %v389
      %v431 = vpack.c.b16 %v392, %v391
      %v432 = vpack.c.b16 %v394, %v393
      %v433 = vpack.c.b16 %v396, %v395
      %v434 = vpack.c.b16 %v398, %v397
      %v435 = vpack.c.b16 %v400, %v399
      %v436 = vpack.c.b16 %v402, %v401
      %v437 = vpack.c.b16 %v404, %v403
      %v438 = vpack.c.b16 %v406, %v405
      %v439 = vpack.c.b16 %v408, %v407
      %v440 = vpack.c.b16 %v410, %v409
      %v441 = vpack.c.b16 %v412, %v411
      %v442 = vpack.c.b16 %v414, %v413
      %v443 = vpack.c.b16 %v416, %v415
      %v444 = vpack.c.b16 %v418, %v417
      %v445 = vpack.c.b16 %v420, %v419
      %v446 = vpack.c.b16 %v422, %v421
      %471 = vmatprep.subr.bf16.mxu0 0
      %472 = vmatpush1.bf16.msra.mxu0 %v430
      %473 = vmatprep.subr.bf16.mxu0 0
      %474 = vmatpush1.bf16.msra.mxu0 %v429
      %475 = vmatprep.subr.bf16.mxu0 0
      %476 = vmatpush1.bf16.msra.mxu0 %v428
      %477 = vmatprep.subr.bf16.mxu0 0
      %478 = vmatpush1.bf16.msra.mxu0 %v427
      %479 = vmatprep.subr.bf16.mxu0 0
      %480 = vmatpush1.bf16.msra.mxu0 %v426
      %481 = vmatprep.subr.bf16.mxu0 0
      %482 = vmatpush1.bf16.msra.mxu0 %v425
      %483 = vmatprep.subr.bf16.mxu0 0
      %484 = vmatpush1.bf16.msra.mxu0 %v424
      %485 = vmatprep.subr.bf16.mxu0 0
      %486 = vmatpush1.bf16.msra.mxu0 %v423
      %487 = vmatprep.subr.bf16.mxu0 0
      %488 = vmatpush2.bf16.msra.mxu0 %v438
      %489 = vmatprep.subr.bf16.mxu0 0
      %490 = vmatpush2.bf16.msra.mxu0 %v437
      %491 = vmatprep.subr.bf16.mxu0 0
      %492 = vmatpush2.bf16.msra.mxu0 %v436
      %493 = vmatprep.subr.bf16.mxu0 0
      %494 = vmatpush2.bf16.msra.mxu0 %v435
      %495 = vmatprep.subr.bf16.mxu0 0
      %496 = vmatpush2.bf16.msra.mxu0 %v434
      %497 = vmatprep.subr.bf16.mxu0 0
      %498 = vmatpush2.bf16.msra.mxu0 %v433
      %499 = vmatprep.subr.bf16.mxu0 0
      %500 = vmatpush2.bf16.msra.mxu0 %v432
      %501 = vmatprep.subr.bf16.mxu0 0
      %502 = vmatpush2.bf16.msra.mxu0 %v431
      %503 = vmatprep.mubr.bf16.mxu0 %v259
      %504 = vmatmul.mubr.bf16.gmra.mxu0 %v271
      %v505 = vpop.f32.mrf.mxu0
      %v506 = vadd.f32 0.0, %v505
      %v507 = vpop.f32.mrf.mxu0
      %v508 = vpop.f32.mrf.mxu0
      %v509 = vadd.f32 0.0, %v508
      %v510 = vpop.f32.mrf.mxu0
      %511 = vdwg.mxu0
      %512 = vmatprep.subr.bf16.mxu0 0
      %513 = vmatpush1.bf16.msra.mxu0 %v446
      %514 = vmatprep.subr.bf16.mxu0 0
      %515 = vmatpush1.bf16.msra.mxu0 %v445
      %516 = vmatprep.subr.bf16.mxu0 0
      %517 = vmatpush1.bf16.msra.mxu0 %v444
      %518 = vmatprep.subr.bf16.mxu0 0
      %519 = vmatpush1.bf16.msra.mxu0 %v443
      %520 = vmatprep.subr.bf16.mxu0 0
      %521 = vmatpush1.bf16.msra.mxu0 %v442
      %522 = vmatprep.subr.bf16.mxu0 0
      %523 = vmatpush1.bf16.msra.mxu0 %v441
      %524 = vmatprep.subr.bf16.mxu0 0
      %525 = vmatpush1.bf16.msra.mxu0 %v440
      %526 = vmatprep.subr.bf16.mxu0 0
      %527 = vmatpush1.bf16.msra.mxu0 %v439
      %528 = vmatprep.subr.bf16.mxu0 0
      %529 = vmatpush2.bf16.msra.mxu0 0
      %530 = vmatprep.subr.bf16.mxu0 0
      %531 = vmatpush2.bf16.msra.mxu0 0
      %532 = vmatprep.subr.bf16.mxu0 0
      %533 = vmatpush2.bf16.msra.mxu0 0
      %534 = vmatprep.subr.bf16.mxu0 0
      %535 = vmatpush2.bf16.msra.mxu0 0
      %536 = vmatprep.subr.bf16.mxu0 0
      %537 = vmatpush2.bf16.msra.mxu0 0
      %538 = vmatprep.subr.bf16.mxu0 0
      %539 = vmatpush2.bf16.msra.mxu0 0
      %540 = vmatprep.subr.bf16.mxu0 0
      %541 = vmatpush2.bf16.msra.mxu0 0
      %542 = vmatprep.subr.bf16.mxu0 0
      %543 = vmatpush2.bf16.msra.mxu0 0
      %544 = vmatprep.mubr.bf16.mxu0 0
      %545 = vmatmul.mubr.bf16.gmra.mxu0 %v278
      %v546 = vpop.f32.mrf.mxu0
      %v547 = vadd.f32 %v506, %v546
      %v548 = vpop.f32.mrf.mxu0
      %v549 = vpop.f32.mrf.mxu0
      %v550 = vadd.f32 %v509, %v549
      %v551 = vpop.f32.mrf.mxu0
      %552 = vdwg.mxu0
      %553 = vst [vmem:[%s231] sm:$0xff] %v547
      %554 = vst [vmem:[%s231 + $0x8] sm:$0xff] %v550
      %v555 = vadd.f32 %v547, %v550
      %v556 = vrot.slane %v555, 4
      %v557 = vadd.f32 %v555, %v556
      %v558 = vrot.slane %v557, 2
      %v559 = vadd.f32 %v557, %v558
      %v560 = vrot.slane %v559, 1
      %v561 = vadd.f32 %v559, %v560
      %v562 = vmul.f32 %v547, %v547
      %v563 = vmul.f32 %v550, %v550
      %v564 = vadd.f32 %v562, %v563
      %v565 = vrot.slane %v564, 4
      %v566 = vadd.f32 %v564, %v565
      %v567 = vrot.slane %v566, 2
      %v568 = vadd.f32 %v566, %v567
      %v569 = vrot.slane %v568, 1
      %v570 = vadd.f32 %v568, %v569
      %vm571 = vcmask 1040384
      %v572 = vsel %vm571, %v561, %v570
      %573 = vst [vmem:[%s235] sm:$0x3] %v572
      %p574 = scmp.lt.s32.totalorder %s17, 1
      %s575 = scalar_select %p574, %s17, 1
      %s576 = smul.addr %s575, 2
      %s577 = smul.addr %s576, 8
      %s578 = scalar_lea.vmem %s4, %s577
      %p579 = scmp.lt.s32.totalorder %s17, 1
      %s580 = scalar_select %p579, %s17, 1
      %s581 = smul.addr %s580, 2
      %s582 = scalar_lea.vmem %s5, %s581
      // Predicated region
      $region37: #{residual_block.4} parent=35 // pred_check
        %p583 = pneg %p124
      $region38: #{residual_block.4} parent=35 // pred_check_branch
        %585 = sbr.rel (%p583) target = $region40
      $region39: #{residual_block.4} parent=35 // pred_region
        _
      $region40: #{residual_block.4} parent=35 // pred_fallthru
        _
      // Predicated region
      $region41: #{residual_block.4} parent=35 // pred_check
        %p586 = pneg %p150
      $region42: #{residual_block.4} parent=35 // pred_check_branch
        %588 = sbr.rel (%p586) target = $region44
      $region43: #{residual_block.4} parent=35 // pred_region
        _
      $region44: #{residual_block.4} parent=35 // pred_fallthru
        _
    $region36: #{residual_block.4} parent=5 // pred_fallthru
      _
    %p589 = scmp.le.s32.totalorder 2, %s12
    // Predicated region
    $region45: #{residual_block.4} parent=5 // pred_check
      %p590 = pneg %p589
    $region46: #{residual_block.4} parent=5 // pred_check_branch
      %592 = sbr.rel (%p590) target = $region48
    $region47: #{residual_block.4} parent=5 // pred_region
      %s593 = ssub.s32 %s12, 2
      // Predicated region
      $region49: #{residual_block.4} parent=47 // pred_check
        %p594 = pneg %p130
      $region50: #{residual_block.4} parent=47 // pred_check_branch
        %596 = sbr.rel (%p594) target = $region52
      $region51: #{residual_block.4} parent=47 // pred_region
        %p597 = scmp.lt.s32.totalorder %s18, 1
        %s598 = scalar_select %p597, %s18, 1
        %s599 = smul.addr %s598, 2
        %s600 = smul.addr %s599, 8
        %s601 = scalar_lea.vmem %s4, %s600
      $region52: #{residual_block.4} parent=47 // pred_fallthru
        _
      // Predicated region
      $region53: #{residual_block.4} parent=47 // pred_check
        %p602 = pneg %p156
      $region54: #{residual_block.4} parent=47 // pred_check_branch
        %604 = sbr.rel (%p602) target = $region56
      $region55: #{residual_block.4} parent=47 // pred_region
        %p605 = scmp.lt.s32.totalorder %s18, 1
        %s606 = scalar_select %p605, %s18, 1
        %s607 = smul.addr %s606, 2
        %s608 = scalar_lea.vmem %s5, %s607
      $region56: #{residual_block.4} parent=47 // pred_fallthru
        _
    $region48: #{residual_block.4} parent=5 // pred_fallthru
      _
  $region6: #{residual_block.4} parent=0 // loop_footer
    %s16 = sadd.s32 1, %s12
  $region7: #{residual_block.4} parent=0 // loop_footer_branch
    %11 = sbr.rel target = $region3
  $region8: #{residual_block.4} parent=0 // loop_exit
    _

</llo_original>
